<compile_context>
chip_gen: v7x
topology: tpu7x:2x2x1
jax: 0.10.0
libtpu: 0.0.40
codegen_flags: <defaults>
</compile_context>

<pallas_src>
import jax
import jax.numpy as jnp
from jax.experimental import pallas as pl
from jax.experimental.pallas import tpu as pltpu

# Tile-aligned sizes.
B = 256        # batch (grid of B // TB batch tiles)
S = 128        # state_dim
H = 128        # hidden
U = 4          # num users            (bs_probs dim 1)
NBS = 32       # num base stations    (bs_probs dim 2, softmax axis)
G = U * NBS    # flat head width = 128 lanes (lane-dense)
TB = 128       # batch tile (M dim of every matmul)
OUT_W = 128    # lane-dense output width; wrapper slices [:, :1]


def actor_wrapper_kernel(state_ref, w1_ref, b1_ref, w2_ref, b2_ref,
                         wbs_ref, bbs_ref, gmat_ref, gmat_t_ref, out_ref):
    x = state_ref[...]                                                 # (TB, S) bf16

    # --- actor MLP trunk: bf16 MXU matmuls, f32 accumulate, f32 relu ---
    h1 = jnp.dot(x, w1_ref[...], preferred_element_type=jnp.float32) + b1_ref[...]
    h1 = jnp.maximum(h1, 0.0)                                          # (TB, H) f32
    h2 = jnp.dot(h1.astype(jnp.bfloat16), w2_ref[...],
                 preferred_element_type=jnp.float32) + b2_ref[...]
    h2 = jnp.maximum(h2, 0.0)                                          # (TB, H) f32

    # --- bs head: flat logits over all users, lane-dense (TB, G=128) ---
    logits = jnp.dot(h2.astype(jnp.bfloat16), wbs_ref[...],
                     preferred_element_type=jnp.float32) + bbs_ref[...]

    # Grouped (per-user) softmax over NBS without unrolled lane-sparse slices.
    # Subtracting the row-global max is a constant shift within every group,
    # so the per-group softmax is exact and numerically stable.
    m = jnp.max(logits, axis=-1, keepdims=True)                        # XLU reduce
    e = jnp.exp(logits - m)                                            # EUP, (TB, G)
    gsum = jnp.dot(e, gmat_ref[...],
                   preferred_element_type=jnp.float32)                 # (TB, U) group sums
    recip = pl.reciprocal(gsum, approx=True)                           # EUP vrcp
    recip_full = jnp.dot(recip, gmat_t_ref[...],
                         preferred_element_type=jnp.float32)           # (TB, G)
    probs = e * recip_full                                             # softmax probs (flat (U, NBS))

    # mean over (users, base-stations) == mean of the flat (TB, G) prob row.
    mean = jnp.sum(probs, axis=-1, keepdims=True) * (1.0 / G)          # (TB, 1)

    # Lane-dense store: broadcast across 128 lanes (unmasked vst); wrapper
    # recovers column 0.
    out_ref[...] = jnp.broadcast_to(mean, out_ref.shape)


def actor_wrapper_forward(state, params):
    w1, b1, w2, b2, wbs, bbs = params

    # One-time bf16 cast for MXU inputs (outside the kernel); biases stay f32.
    state_b = state.astype(jnp.bfloat16)
    w1_b = w1.astype(jnp.bfloat16)
    w2_b = w2.astype(jnp.bfloat16)
    wbs_b = wbs.astype(jnp.bfloat16)

    # Block-diagonal group matrix (G, U): column u indicates user u's NBS slots.
    group_ids = jnp.repeat(jnp.arange(U), NBS)
    gmat = jax.nn.one_hot(group_ids, U, dtype=jnp.float32)             # (G, U)
    gmat_t = gmat.T                                                    # (U, G)

    tile = lambda i: (i, 0)
    whole = lambda i: (0, 0)

    out = pl.pallas_call(
        actor_wrapper_kernel,
        out_shape=jax.ShapeDtypeStruct((B, OUT_W), jnp.float32),
        grid=(B // TB,),
        in_specs=[
            pl.BlockSpec((TB, S), tile),        # state tile
            pl.BlockSpec((S, H), whole),        # w1
            pl.BlockSpec((1, H), whole),        # b1
            pl.BlockSpec((H, H), whole),        # w2
            pl.BlockSpec((1, H), whole),        # b2
            pl.BlockSpec((H, G), whole),        # wbs
            pl.BlockSpec((1, G), whole),        # bbs
            pl.BlockSpec((G, U), whole),        # group-sum matrix
            pl.BlockSpec((U, G), whole),        # group broadcast matrix
        ],
        out_specs=pl.BlockSpec((TB, OUT_W), tile),
        compiler_params=pltpu.CompilerParams(
            dimension_semantics=("parallel",)),   # batch tiles independent -> both TCs on v7x
    )(state_b, w1_b, b1, w2_b, b2, wbs_b, bbs, gmat, gmat_t)

    return out[:, :1]        # (B, 1) == mean(dim=(1,2)).unsqueeze(-1)


def init_params(key):
    ks = jax.random.split(key, 6)
    scale = 0.1
    w1 = scale * jax.random.normal(ks[0], (S, H), jnp.float32)
    b1 = scale * jax.random.normal(ks[1], (1, H), jnp.float32)
    w2 = scale * jax.random.normal(ks[2], (H, H), jnp.float32)
    b2 = scale * jax.random.normal(ks[3], (1, H), jnp.float32)
    wbs = scale * jax.random.normal(ks[4], (H, G), jnp.float32)
    bbs = scale * jax.random.normal(ks[5], (1, G), jnp.float32)
    return w1, b1, w2, b2, wbs, bbs


def reference_forward(state, params):
    """Plain-JAX (f32) reference matching the PyTorch semantics."""
    w1, b1, w2, b2, wbs, bbs = params
    h1 = jax.nn.relu(state @ w1 + b1)
    h2 = jax.nn.relu(h1 @ w2 + b2)
    logits = (h2 @ wbs + bbs).reshape(state.shape[0], U, NBS)
    bs_probs = jax.nn.softmax(logits, axis=-1)
    return bs_probs.mean(axis=(1, 2))[:, None]


if __name__ == "__main__":
    key = jax.random.PRNGKey(0)
    k_state, k_params = jax.random.split(key)
    state = jax.random.normal(k_state, (B, S), jnp.float32)
    params = init_params(k_params)

    out = jax.block_until_ready(actor_wrapper_forward(state, params))
    ref = reference_forward(state, params)

    assert out.shape == (B, 1), out.shape
    # bf16 matmul inputs + approx reciprocal vs f32 reference: small, bounded
    # relative error on an O(1/NBS) quantity.
    assert jnp.allclose(out, ref, atol=5e-4, rtol=1e-2), (out[:4], ref[:4])

    print("KERNEL_OK")
</pallas_src>

<mosaic_0001>
module attributes {stable_mosaic.version = 11 : i64} {
  func.func @actor_wrapper_kernel(%arg0: i32, %arg1: memref<128x128xbf16, #tpu.memory_space<vmem>>, %arg2: memref<128x128xbf16, #tpu.memory_space<vmem>>, %arg3: memref<1x128xf32, #tpu.memory_space<vmem>>, %arg4: memref<128x128xbf16, #tpu.memory_space<vmem>>, %arg5: memref<1x128xf32, #tpu.memory_space<vmem>>, %arg6: memref<128x128xbf16, #tpu.memory_space<vmem>>, %arg7: memref<1x128xf32, #tpu.memory_space<vmem>>, %arg8: memref<128x4xf32, #tpu.memory_space<vmem>>, %arg9: memref<4x128xf32, #tpu.memory_space<vmem>>, %arg10: memref<128x128xf32, #tpu.memory_space<vmem>>) attributes {dimension_semantics = [#tpu.dimension_semantics<parallel>], iteration_bounds = array<i64: 2>, scalar_prefetch = 0 : i64, scratch_operands = 0 : i64, tpu.core_type = #tpu.core_type<tc>, window_params = [{transform_indices = @transform_0, window_bounds = array<i64: 128, 128>}, {pipeline_mode = #tpu.pipeline_mode<synchronous>, transform_indices = @transform_1, window_bounds = array<i64: 128, 128>}, {pipeline_mode = #tpu.pipeline_mode<synchronous>, transform_indices = @transform_2, window_bounds = array<i64: 1, 128>}, {pipeline_mode = #tpu.pipeline_mode<synchronous>, transform_indices = @transform_3, window_bounds = array<i64: 128, 128>}, {pipeline_mode = #tpu.pipeline_mode<synchronous>, transform_indices = @transform_4, window_bounds = array<i64: 1, 128>}, {pipeline_mode = #tpu.pipeline_mode<synchronous>, transform_indices = @transform_5, window_bounds = array<i64: 128, 128>}, {pipeline_mode = #tpu.pipeline_mode<synchronous>, transform_indices = @transform_6, window_bounds = array<i64: 1, 128>}, {pipeline_mode = #tpu.pipeline_mode<synchronous>, transform_indices = @transform_7, window_bounds = array<i64: 128, 4>}, {pipeline_mode = #tpu.pipeline_mode<synchronous>, transform_indices = @transform_8, window_bounds = array<i64: 4, 128>}, {transform_indices = @transform_9, window_bounds = array<i64: 128, 128>}]} {
    %c0 = arith.constant 0 : index
    %c0_0 = arith.constant 0 : index
    %0 = vector.load %arg1[%c0, %c0_0] : memref<128x128xbf16, #tpu.memory_space<vmem>>, vector<128x128xbf16>
    %c0_1 = arith.constant 0 : index
    %c0_2 = arith.constant 0 : index
    %1 = vector.load %arg2[%c0_1, %c0_2] : memref<128x128xbf16, #tpu.memory_space<vmem>>, vector<128x128xbf16>
    %cst = arith.constant dense<0.000000e+00> : vector<128x128xf32>
    %2 = tpu.matmul %0, %1, %cst {dimension_numbers = #tpu.dot_dimension_numbers<[1], [0], [0], [1], [0, 0, 1, 1], [], []>} : vector<128x128xbf16>, vector<128x128xbf16>, vector<128x128xf32> -> vector<128x128xf32>
    %c0_3 = arith.constant 0 : index
    %c0_4 = arith.constant 0 : index
    %3 = vector.load %arg3[%c0_3, %c0_4] : memref<1x128xf32, #tpu.memory_space<vmem>>, vector<1x128xf32>
    %4 = vector.broadcast %3 : vector<1x128xf32> to vector<128x128xf32>
    %5 = arith.addf %2, %4 : vector<128x128xf32>
    %cst_5 = arith.constant 0.000000e+00 : f32
    %6 = vector.broadcast %cst_5 : f32 to vector<128x128xf32>
    %7 = arith.maximumf %5, %6 : vector<128x128xf32>
    %8 = arith.truncf %7 : vector<128x128xf32> to vector<128x128xbf16>
    %c0_6 = arith.constant 0 : index
    %c0_7 = arith.constant 0 : index
    %9 = vector.load %arg4[%c0_6, %c0_7] : memref<128x128xbf16, #tpu.memory_space<vmem>>, vector<128x128xbf16>
    %cst_8 = arith.constant dense<0.000000e+00> : vector<128x128xf32>
    %10 = tpu.matmul %8, %9, %cst_8 {dimension_numbers = #tpu.dot_dimension_numbers<[1], [0], [0], [1], [0, 0, 1, 1], [], []>} : vector<128x128xbf16>, vector<128x128xbf16>, vector<128x128xf32> -> vector<128x128xf32>
    %c0_9 = arith.constant 0 : index
    %c0_10 = arith.constant 0 : index
    %11 = vector.load %arg5[%c0_9, %c0_10] : memref<1x128xf32, #tpu.memory_space<vmem>>, vector<1x128xf32>
    %12 = vector.broadcast %11 : vector<1x128xf32> to vector<128x128xf32>
    %13 = arith.addf %10, %12 : vector<128x128xf32>
    %cst_11 = arith.constant 0.000000e+00 : f32
    %14 = vector.broadcast %cst_11 : f32 to vector<128x128xf32>
    %15 = arith.maximumf %13, %14 : vector<128x128xf32>
    %16 = arith.truncf %15 : vector<128x128xf32> to vector<128x128xbf16>
    %c0_12 = arith.constant 0 : index
    %c0_13 = arith.constant 0 : index
    %17 = vector.load %arg6[%c0_12, %c0_13] : memref<128x128xbf16, #tpu.memory_space<vmem>>, vector<128x128xbf16>
    %cst_14 = arith.constant dense<0.000000e+00> : vector<128x128xf32>
    %18 = tpu.matmul %16, %17, %cst_14 {dimension_numbers = #tpu.dot_dimension_numbers<[1], [0], [0], [1], [0, 0, 1, 1], [], []>} : vector<128x128xbf16>, vector<128x128xbf16>, vector<128x128xf32> -> vector<128x128xf32>
    %c0_15 = arith.constant 0 : index
    %c0_16 = arith.constant 0 : index
    %19 = vector.load %arg7[%c0_15, %c0_16] : memref<1x128xf32, #tpu.memory_space<vmem>>, vector<1x128xf32>
    %20 = vector.broadcast %19 : vector<1x128xf32> to vector<128x128xf32>
    %21 = arith.addf %18, %20 : vector<128x128xf32>
    %cst_17 = arith.constant dense<0xFF800000> : vector<128xf32>
    %22 = vector.multi_reduction <maximumf>, %21, %cst_17 [1] : vector<128x128xf32> to vector<128xf32>
    %23 = vector.shape_cast %22 : vector<128xf32> to vector<128x1xf32>
    %24 = vector.broadcast %23 : vector<128x1xf32> to vector<128x128xf32>
    %25 = arith.subf %21, %24 : vector<128x128xf32>
    %26 = math.exp %25 : vector<128x128xf32>
    %c0_18 = arith.constant 0 : index
    %c0_19 = arith.constant 0 : index
    %27 = vector.load %arg8[%c0_18, %c0_19] : memref<128x4xf32, #tpu.memory_space<vmem>>, vector<128x4xf32>
    %cst_20 = arith.constant dense<0.000000e+00> : vector<128x4xf32>
    %28 = tpu.matmul %26, %27, %cst_20 {dimension_numbers = #tpu.dot_dimension_numbers<[1], [0], [0], [1], [0, 0, 1, 1], [], []>} : vector<128x128xf32>, vector<128x4xf32>, vector<128x4xf32> -> vector<128x4xf32>
    %29 = tpu.reciprocal %28 {approx = true} : vector<128x4xf32> -> vector<128x4xf32>
    %c0_21 = arith.constant 0 : index
    %c0_22 = arith.constant 0 : index
    %30 = vector.load %arg9[%c0_21, %c0_22] : memref<4x128xf32, #tpu.memory_space<vmem>>, vector<4x128xf32>
    %cst_23 = arith.constant dense<0.000000e+00> : vector<128x128xf32>
    %31 = tpu.matmul %29, %30, %cst_23 {dimension_numbers = #tpu.dot_dimension_numbers<[1], [0], [0], [1], [0, 0, 1, 1], [], []>} : vector<128x4xf32>, vector<4x128xf32>, vector<128x128xf32> -> vector<128x128xf32>
    %32 = arith.mulf %26, %31 : vector<128x128xf32>
    %cst_24 = arith.constant dense<0.000000e+00> : vector<128xf32>
    %33 = vector.multi_reduction <add>, %32, %cst_24 [1] : vector<128x128xf32> to vector<128xf32>
    %34 = vector.shape_cast %33 : vector<128xf32> to vector<128x1xf32>
    %cst_25 = arith.constant 7.812500e-03 : f32
    %35 = vector.broadcast %cst_25 : f32 to vector<128x1xf32>
    %36 = arith.mulf %34, %35 : vector<128x1xf32>
    %37 = vector.shape_cast %36 : vector<128x1xf32> to vector<128x1xf32>
    %38 = vector.broadcast %37 : vector<128x1xf32> to vector<128x128xf32>
    %c0_26 = arith.constant 0 : index
    %c0_27 = arith.constant 0 : index
    %39 = vector.load %arg10[%c0_26, %c0_27] : memref<128x128xf32, #tpu.memory_space<vmem>>, vector<128x128xf32>
    tpu.vector_store %arg10[%c0_26, %c0_27], %38 {strides = array<i32>} : memref<128x128xf32, #tpu.memory_space<vmem>>, vector<128x128xf32>,
    return
  }
  func.func @transform_0(%arg0: i32) -> (i32, i32) {
    %c0_i32 = arith.constant 0 : i32
    %c0_i32_0 = arith.constant 0 : i32
    return %arg0, %c0_i32 : i32, i32
  }
  func.func @transform_1(%arg0: i32) -> (i32, i32) {
    %c0_i32 = arith.constant 0 : i32
    %c0_i32_0 = arith.constant 0 : i32
    %c0_i32_1 = arith.constant 0 : i32
    return %c0_i32, %c0_i32_0 : i32, i32
  }
  func.func @transform_2(%arg0: i32) -> (i32, i32) {
    %c0_i32 = arith.constant 0 : i32
    %c0_i32_0 = arith.constant 0 : i32
    %c0_i32_1 = arith.constant 0 : i32
    return %c0_i32, %c0_i32_0 : i32, i32
  }
  func.func @transform_3(%arg0: i32) -> (i32, i32) {
    %c0_i32 = arith.constant 0 : i32
    %c0_i32_0 = arith.constant 0 : i32
    %c0_i32_1 = arith.constant 0 : i32
    return %c0_i32, %c0_i32_0 : i32, i32
  }
  func.func @transform_4(%arg0: i32) -> (i32, i32) {
    %c0_i32 = arith.constant 0 : i32
    %c0_i32_0 = arith.constant 0 : i32
    %c0_i32_1 = arith.constant 0 : i32
    return %c0_i32, %c0_i32_0 : i32, i32
  }
  func.func @transform_5(%arg0: i32) -> (i32, i32) {
    %c0_i32 = arith.constant 0 : i32
    %c0_i32_0 = arith.constant 0 : i32
    %c0_i32_1 = arith.constant 0 : i32
    return %c0_i32, %c0_i32_0 : i32, i32
  }
  func.func @transform_6(%arg0: i32) -> (i32, i32) {
    %c0_i32 = arith.constant 0 : i32
    %c0_i32_0 = arith.constant 0 : i32
    %c0_i32_1 = arith.constant 0 : i32
    return %c0_i32, %c0_i32_0 : i32, i32
  }
  func.func @transform_7(%arg0: i32) -> (i32, i32) {
    %c0_i32 = arith.constant 0 : i32
    %c0_i32_0 = arith.constant 0 : i32
    %c0_i32_1 = arith.constant 0 : i32
    return %c0_i32, %c0_i32_0 : i32, i32
  }
  func.func @transform_8(%arg0: i32) -> (i32, i32) {
    %c0_i32 = arith.constant 0 : i32
    %c0_i32_0 = arith.constant 0 : i32
    %c0_i32_1 = arith.constant 0 : i32
    return %c0_i32, %c0_i32_0 : i32, i32
  }
  func.func @transform_9(%arg0: i32) -> (i32, i32) {
    %c0_i32 = arith.constant 0 : i32
    %c0_i32_0 = arith.constant 0 : i32
    return %arg0, %c0_i32 : i32, i32
  }
}

</mosaic_0001>

<llo_original>
// kernel: tpu_custom_call.1
$region0: #{tpu_custom_call.1}
  #allocation0 [shape = 'u32[]', space=smem, size = 0x4, offset = 0x4, fixed_abs, tag = 'smem constant byte address 0x4 - core index']
  #allocation1 [shape = 'u32[144,128]{1,0:T(1,128)}', space=vmem, size = 0x12000, scoped, tag = 'internal scratch']
  %s0 = inlined_call_operand.vmem [shape: bf16[256,128], index: 0, kind: input, shape index: {}]
  %s1 = inlined_call_operand.hbm [shape: bf16[128,128], index: 1, kind: input, shape index: {}]
  %s2 = inlined_call_operand.vmem [shape: f32[1,128], index: 2, kind: input, shape index: {}]
  %s3 = inlined_call_operand.hbm [shape: bf16[128,128], index: 3, kind: input, shape index: {}]
  %s4 = inlined_call_operand.vmem [shape: f32[1,128], index: 4, kind: input, shape index: {}]
  %s5 = inlined_call_operand.hbm [shape: bf16[128,128], index: 5, kind: input, shape index: {}]
  %s6 = inlined_call_operand.vmem [shape: f32[1,128], index: 6, kind: input, shape index: {}]
  %s7 = inlined_call_operand.vmem [shape: f32[128,4], index: 7, kind: input, shape index: {}]
  %s8 = inlined_call_operand.vmem [shape: f32[4,128], index: 8, kind: input, shape index: {}]
  %s9 = inlined_call_operand.hbm [shape: f32[256,128], index: 9, kind: output, shape index: {}]
  %s10 = sld [smem:[#allocation0]]
  $region81: #{tpu_custom_call.1} parent=0
    _
  %s12 = ssub.s32 1, %s10
  %s13 = scalar_select 0, %s12, %s10
  $region1: #{tpu_custom_call.1} parent=0
    #allocation2 [shape = 'u8[32768]{0}', space=vmem, size = 0x8000, scoped, tag = 'input window, operand 1, single buffered']
    #allocation3 [shape = 's32[2]{0}', space=sflag, size = 0x8, scoped, tag = 'scoped memory for tpu_custom_call.1']
    #allocation4 [shape = 's32[2]{0}', space=sflag, size = 0x8, scoped, tag = 'scoped memory for tpu_custom_call.1']
    #allocation5 [shape = 'u8[32768]{0}', space=vmem, size = 0x8000, scoped, tag = 'input window, operand 3, single buffered']
    #allocation6 [shape = 's32[1]{0}', space=sflag, size = 0x4, scoped, tag = 'scoped memory for tpu_custom_call.1']
    #allocation7 [shape = 'u8[32768]{0}', space=vmem, size = 0x8000, scoped, tag = 'input window, operand 5, single buffered']
    #allocation8 [shape = 'u8[131072]{0}', space=vmem, size = 0x20000, scoped, tag = 'output window, operand 0']
    %14 = vsyncpa [#allocation3], 0
    %15 = vsyncpa [#allocation6], 0
    %16 = vsyncpa [#allocation4], 0
    %s17 = scalar_lea.sflag [#allocation4], 1
    %18 = vsyncpa %s17, 0
    loop: start=0, step=1, limit=4
    $region2: #{tpu_custom_call.1} parent=1 // loop_pre_header
      _
    $region3: #{tpu_custom_call.1} parent=1 // loop_header
      %s20 = sphi 0, %s24
      %p21 = scmp.ge.s32.totalorder %s20, 4
      %s30 = sphi 0, %s32
      %s33 = sphi 0, %s30
      %s34 = sphi 0, %s33
      %s50 = sphi 0, %s34
      %s54 = sphi 0, %s54
      %s56 = sphi 0, %s54
      %s57 = sphi 0, %s56
      %s71 = sphi 0, %s57
      %s75 = sphi 0, %s75
      %s77 = sphi 0, %s75
      %s78 = sphi 0, %s77
      %s92 = sphi 0, %s78
      %s96 = sphi 0, %s96
      %s98 = sphi 0, %s96
      %s99 = sphi 0, %s98
      %s113 = sphi 0, %s99
      %s117 = sphi 0, %s117
      %s119 = sphi 0, %s117
      %s120 = sphi 0, %s119
      %s134 = sphi 0, %s120
      %s138 = sphi 0, %s138
      %s140 = sphi 0, %s138
      %s141 = sphi 0, %s140
      %s155 = sphi 0, %s141
      %s159 = sphi 0, %s159
      %s161 = sphi 0, %s159
      %s162 = sphi 0, %s161
      %s176 = sphi 0, %s162
      %s180 = sphi 0, %s180
      %s182 = sphi 0, %s180
      %s183 = sphi 0, %s182
      %s197 = sphi 0, %s183
      %s201 = sphi 0, %s201
      %s203 = sphi 0, %s201
      %s204 = sphi 0, %s203
      %s218 = sphi 0, %s204
      %s224 = sphi 0, %s226
      %s227 = sphi 0, %s224
      %s228 = sphi 0, %s227
      %s244 = sphi 0, %s228
    $region4: #{tpu_custom_call.1} parent=1 // loop_header_branch
      %23 = sbr.rel (%p21) target = $region8
    $region5: #{tpu_custom_call.1} parent=1 // loop_body
      %s25 = ssub.s32 %s20, 1
      %s26 = ssub.s32 %s20, 2
      %s27 = sadd.s32 %s20, 1
      %s28 = ssub.s32 %s20, %s27
      %p29 = scmp.eq.s32.totalorder %s28, 0
      %s31 = sadd.s32 %s30, 1
      %s32 = scalar_select %p29, %s30, %s31
      %p35 = pneg %p29
      %p36 = scmp.eq.s32.totalorder %s20, 1
      %p37 = por %p35, %p36
      %p38 = scmp.ne.s32.totalorder %s30, %s33
      %p39 = scmp.eq.s32.totalorder %s20, 0
      %p40 = por %p38, %p39
      %p41 = scmp.ne.s32.totalorder %s30, %s33
      %p42 = scmp.eq.s32.totalorder %s25, 1
      %p43 = por %p41, %p42
      %p44 = scmp.ne.s32.totalorder %s33, %s34
      %p45 = scmp.eq.s32.totalorder %s25, 0
      %p46 = por %p44, %p45
      %p47 = scmp.ne.s32.totalorder %s33, %s34
      %p48 = scmp.eq.s32.totalorder %s26, 1
      %p49 = por %p47, %p48
      %p51 = scmp.ne.s32.totalorder %s34, %s50
      %p52 = scmp.eq.s32.totalorder %s26, 0
      %p53 = por %p51, %p52
      %s55 = sadd.s32 %s54, 1
      %p58 = scmp.eq.s32.totalorder %s20, 1
      %p59 = scmp.ne.s32.totalorder %s54, %s56
      %p60 = scmp.eq.s32.totalorder %s20, 0
      %p61 = por %p59, %p60
      %p62 = scmp.ne.s32.totalorder %s54, %s56
      %p63 = scmp.eq.s32.totalorder %s25, 1
      %p64 = por %p62, %p63
      %p65 = scmp.ne.s32.totalorder %s56, %s57
      %p66 = scmp.eq.s32.totalorder %s25, 0
      %p67 = por %p65, %p66
      %p68 = scmp.ne.s32.totalorder %s56, %s57
      %p69 = scmp.eq.s32.totalorder %s26, 1
      %p70 = por %p68, %p69
      %p72 = scmp.ne.s32.totalorder %s57, %s71
      %p73 = scmp.eq.s32.totalorder %s26, 0
      %p74 = por %p72, %p73
      %s76 = sadd.s32 %s75, 1
      %p79 = scmp.eq.s32.totalorder %s20, 1
      %p80 = scmp.ne.s32.totalorder %s75, %s77
      %p81 = scmp.eq.s32.totalorder %s20, 0
      %p82 = por %p80, %p81
      %p83 = scmp.ne.s32.totalorder %s75, %s77
      %p84 = scmp.eq.s32.totalorder %s25, 1
      %p85 = por %p83, %p84
      %p86 = scmp.ne.s32.totalorder %s77, %s78
      %p87 = scmp.eq.s32.totalorder %s25, 0
      %p88 = por %p86, %p87
      %p89 = scmp.ne.s32.totalorder %s77, %s78
      %p90 = scmp.eq.s32.totalorder %s26, 1
      %p91 = por %p89, %p90
      %p93 = scmp.ne.s32.totalorder %s78, %s92
      %p94 = scmp.eq.s32.totalorder %s26, 0
      %p95 = por %p93, %p94
      %s97 = sadd.s32 %s96, 1
      %p100 = scmp.eq.s32.totalorder %s20, 1
      %p101 = scmp.ne.s32.totalorder %s96, %s98
      %p102 = scmp.eq.s32.totalorder %s20, 0
      %p103 = por %p101, %p102
      %p104 = scmp.ne.s32.totalorder %s96, %s98
      %p105 = scmp.eq.s32.totalorder %s25, 1
      %p106 = por %p104, %p105
      %p107 = scmp.ne.s32.totalorder %s98, %s99
      %p108 = scmp.eq.s32.totalorder %s25, 0
      %p109 = por %p107, %p108
      %p110 = scmp.ne.s32.totalorder %s98, %s99
      %p111 = scmp.eq.s32.totalorder %s26, 1
      %p112 = por %p110, %p111
      %p114 = scmp.ne.s32.totalorder %s99, %s113
      %p115 = scmp.eq.s32.totalorder %s26, 0
      %p116 = por %p114, %p115
      %s118 = sadd.s32 %s117, 1
      %p121 = scmp.eq.s32.totalorder %s20, 1
      %p122 = scmp.ne.s32.totalorder %s117, %s119
      %p123 = scmp.eq.s32.totalorder %s20, 0
      %p124 = por %p122, %p123
      %p125 = scmp.ne.s32.totalorder %s117, %s119
      %p126 = scmp.eq.s32.totalorder %s25, 1
      %p127 = por %p125, %p126
      %p128 = scmp.ne.s32.totalorder %s119, %s120
      %p129 = scmp.eq.s32.totalorder %s25, 0
      %p130 = por %p128, %p129
      %p131 = scmp.ne.s32.totalorder %s119, %s120
      %p132 = scmp.eq.s32.totalorder %s26, 1
      %p133 = por %p131, %p132
      %p135 = scmp.ne.s32.totalorder %s120, %s134
      %p136 = scmp.eq.s32.totalorder %s26, 0
      %p137 = por %p135, %p136
      %s139 = sadd.s32 %s138, 1
      %p142 = scmp.eq.s32.totalorder %s20, 1
      %p143 = scmp.ne.s32.totalorder %s138, %s140
      %p144 = scmp.eq.s32.totalorder %s20, 0
      %p145 = por %p143, %p144
      %p146 = scmp.ne.s32.totalorder %s138, %s140
      %p147 = scmp.eq.s32.totalorder %s25, 1
      %p148 = por %p146, %p147
      %p149 = scmp.ne.s32.totalorder %s140, %s141
      %p150 = scmp.eq.s32.totalorder %s25, 0
      %p151 = por %p149, %p150
      %p152 = scmp.ne.s32.totalorder %s140, %s141
      %p153 = scmp.eq.s32.totalorder %s26, 1
      %p154 = por %p152, %p153
      %p156 = scmp.ne.s32.totalorder %s141, %s155
      %p157 = scmp.eq.s32.totalorder %s26, 0
      %p158 = por %p156, %p157
      %s160 = sadd.s32 %s159, 1
      %p163 = scmp.eq.s32.totalorder %s20, 1
      %p164 = scmp.ne.s32.totalorder %s159, %s161
      %p165 = scmp.eq.s32.totalorder %s20, 0
      %p166 = por %p164, %p165
      %p167 = scmp.ne.s32.totalorder %s159, %s161
      %p168 = scmp.eq.s32.totalorder %s25, 1
      %p169 = por %p167, %p168
      %p170 = scmp.ne.s32.totalorder %s161, %s162
      %p171 = scmp.eq.s32.totalorder %s25, 0
      %p172 = por %p170, %p171
      %p173 = scmp.ne.s32.totalorder %s161, %s162
      %p174 = scmp.eq.s32.totalorder %s26, 1
      %p175 = por %p173, %p174
      %p177 = scmp.ne.s32.totalorder %s162, %s176
      %p178 = scmp.eq.s32.totalorder %s26, 0
      %p179 = por %p177, %p178
      %s181 = sadd.s32 %s180, 1
      %p184 = scmp.eq.s32.totalorder %s20, 1
      %p185 = scmp.ne.s32.totalorder %s180, %s182
      %p186 = scmp.eq.s32.totalorder %s20, 0
      %p187 = por %p185, %p186
      %p188 = scmp.ne.s32.totalorder %s180, %s182
      %p189 = scmp.eq.s32.totalorder %s25, 1
      %p190 = por %p188, %p189
      %p191 = scmp.ne.s32.totalorder %s182, %s183
      %p192 = scmp.eq.s32.totalorder %s25, 0
      %p193 = por %p191, %p192
      %p194 = scmp.ne.s32.totalorder %s182, %s183
      %p195 = scmp.eq.s32.totalorder %s26, 1
      %p196 = por %p194, %p195
      %p198 = scmp.ne.s32.totalorder %s183, %s197
      %p199 = scmp.eq.s32.totalorder %s26, 0
      %p200 = por %p198, %p199
      %s202 = sadd.s32 %s201, 1
      %p205 = scmp.eq.s32.totalorder %s20, 1
      %p206 = scmp.ne.s32.totalorder %s201, %s203
      %p207 = scmp.eq.s32.totalorder %s20, 0
      %p208 = por %p206, %p207
      %p209 = scmp.ne.s32.totalorder %s201, %s203
      %p210 = scmp.eq.s32.totalorder %s25, 1
      %p211 = por %p209, %p210
      %p212 = scmp.ne.s32.totalorder %s203, %s204
      %p213 = scmp.eq.s32.totalorder %s25, 0
      %p214 = por %p212, %p213
      %p215 = scmp.ne.s32.totalorder %s203, %s204
      %p216 = scmp.eq.s32.totalorder %s26, 1
      %p217 = por %p215, %p216
      %p219 = scmp.ne.s32.totalorder %s204, %s218
      %p220 = scmp.eq.s32.totalorder %s26, 0
      %p221 = por %p219, %p220
      %s222 = ssub.s32 %s20, %s27
      %p223 = scmp.eq.s32.totalorder %s222, 0
      %s225 = sadd.s32 %s224, 1
      %s226 = scalar_select %p223, %s224, %s225
      %p229 = pneg %p223
      %p230 = scmp.eq.s32.totalorder %s20, 1
      %p231 = por %p229, %p230
      %p232 = scmp.ne.s32.totalorder %s224, %s227
      %p233 = scmp.eq.s32.totalorder %s20, 0
      %p234 = por %p232, %p233
      %p235 = scmp.ne.s32.totalorder %s224, %s227
      %p236 = scmp.eq.s32.totalorder %s25, 1
      %p237 = por %p235, %p236
      %p238 = scmp.ne.s32.totalorder %s227, %s228
      %p239 = scmp.eq.s32.totalorder %s25, 0
      %p240 = por %p238, %p239
      %p241 = scmp.ne.s32.totalorder %s227, %s228
      %p242 = scmp.eq.s32.totalorder %s26, 1
      %p243 = por %p241, %p242
      %p245 = scmp.ne.s32.totalorder %s228, %s244
      %p246 = scmp.eq.s32.totalorder %s26, 0
      %p247 = por %p245, %p246
      %p248 = scmp.le.s32.totalorder 1, %s20
      %p249 = scmp.lt.s32.totalorder %s20, 3
      %p250 = pnand %p248, %p249
      %p251 = pneg %p250
      // Predicated region
      $region9: #{tpu_custom_call.1} parent=5 // pred_check
        _
      $region10: #{tpu_custom_call.1} parent=5 // pred_check_branch
        %253 = sbr.rel (%p250) target = $region12
      $region11: #{tpu_custom_call.1} parent=5 // pred_region
        %s254 = ssub.s32 %s20, 1
        // Predicated region
        $region13: #{tpu_custom_call.1} parent=11 // pred_check
          %p255 = pneg %p67
        $region14: #{tpu_custom_call.1} parent=11 // pred_check_branch
          %257 = sbr.rel (%p255) target = $region16
        $region15: #{tpu_custom_call.1} parent=11 // pred_region
          %s259 = ssub.s32 1024, 1024
          %260 = vsyncadd [#allocation3], %s259
          %s261 = sshll.u32 [#allocation2], 4
          %s262 = int_to_ptr.vmem [resolvable:$true] %s261
          %267 = dma.hbm_to_vmem [thread:$0]  %s1, 1024, %s262, [#allocation3], 64, 64, 4
        $region16: #{tpu_custom_call.1} parent=11 // pred_fallthru
          _
        // Predicated region
        $region17: #{tpu_custom_call.1} parent=11 // pred_check
          %p268 = pneg %p88
        $region18: #{tpu_custom_call.1} parent=11 // pred_check_branch
          %270 = sbr.rel (%p268) target = $region20
        $region19: #{tpu_custom_call.1} parent=11 // pred_region
          _
        $region20: #{tpu_custom_call.1} parent=11 // pred_fallthru
          _
        // Predicated region
        $region21: #{tpu_custom_call.1} parent=11 // pred_check
          %p271 = pneg %p109
        $region22: #{tpu_custom_call.1} parent=11 // pred_check_branch
          %273 = sbr.rel (%p271) target = $region24
        $region23: #{tpu_custom_call.1} parent=11 // pred_region
          %s275 = ssub.s32 1024, 1024
          %276 = vsyncadd [#allocation6], %s275
          %s277 = sshll.u32 [#allocation5], 4
          %s278 = int_to_ptr.vmem [resolvable:$true] %s277
          %283 = dma.hbm_to_vmem [thread:$0]  %s3, 1024, %s278, [#allocation6], 64, 64, 4
        $region24: #{tpu_custom_call.1} parent=11 // pred_fallthru
          _
        // Predicated region
        $region25: #{tpu_custom_call.1} parent=11 // pred_check
          %p284 = pneg %p130
        $region26: #{tpu_custom_call.1} parent=11 // pred_check_branch
          %286 = sbr.rel (%p284) target = $region28
        $region27: #{tpu_custom_call.1} parent=11 // pred_region
          _
        $region28: #{tpu_custom_call.1} parent=11 // pred_fallthru
          _
        // Predicated region
        $region29: #{tpu_custom_call.1} parent=11 // pred_check
          %p287 = pneg %p151
        $region30: #{tpu_custom_call.1} parent=11 // pred_check_branch
          %289 = sbr.rel (%p287) target = $region32
        $region31: #{tpu_custom_call.1} parent=11 // pred_region
          %s291 = ssub.s32 1024, 1024
          %292 = vsyncadd [#allocation6], %s291
          %s293 = sshll.u32 [#allocation7], 4
          %s294 = int_to_ptr.vmem [resolvable:$true] %s293
          %299 = dma.hbm_to_vmem [thread:$0]  %s5, 1024, %s294, [#allocation6], 64, 64, 4
        $region32: #{tpu_custom_call.1} parent=11 // pred_fallthru
          _
        // Predicated region
        $region33: #{tpu_custom_call.1} parent=11 // pred_check
          %p300 = pneg %p172
        $region34: #{tpu_custom_call.1} parent=11 // pred_check_branch
          %302 = sbr.rel (%p300) target = $region36
        $region35: #{tpu_custom_call.1} parent=11 // pred_region
          _
        $region36: #{tpu_custom_call.1} parent=11 // pred_fallthru
          _
        // Predicated region
        $region37: #{tpu_custom_call.1} parent=11 // pred_check
          %p303 = pneg %p193
        $region38: #{tpu_custom_call.1} parent=11 // pred_check_branch
          %305 = sbr.rel (%p303) target = $region40
        $region39: #{tpu_custom_call.1} parent=11 // pred_region
          _
        $region40: #{tpu_custom_call.1} parent=11 // pred_fallthru
          _
        // Predicated region
        $region41: #{tpu_custom_call.1} parent=11 // pred_check
          %p306 = pneg %p214
        $region42: #{tpu_custom_call.1} parent=11 // pred_check_branch
          %308 = sbr.rel (%p306) target = $region44
        $region43: #{tpu_custom_call.1} parent=11 // pred_region
          _
        $region44: #{tpu_custom_call.1} parent=11 // pred_fallthru
          _
      $region12: #{tpu_custom_call.1} parent=5 // pred_fallthru
        _
      %p309 = scmp.lt.s32.totalorder %s20, 2
      // Predicated region
      $region45: #{tpu_custom_call.1} parent=5 // pred_check
        %p310 = pneg %p309
      $region46: #{tpu_custom_call.1} parent=5 // pred_check_branch
        %312 = sbr.rel (%p310) target = $region48
      $region47: #{tpu_custom_call.1} parent=5 // pred_region
        // Predicated region
        $region49: #{tpu_custom_call.1} parent=47 // pred_check
          %p313 = pneg %p40
        $region50: #{tpu_custom_call.1} parent=47 // pred_check_branch
          %315 = sbr.rel (%p313) target = $region52
        $region51: #{tpu_custom_call.1} parent=47 // pred_region
          %s316 = smul.u32 16, %s20
          %p317 = scmp.lt.s32.totalorder %s316, 31
          %s318 = scalar_select %p317, %s316, 31
          %s319 = smul.addr %s318, 4
          %s320 = scalar_lea.vmem %s0, %s319
          %s321 = smul.u32 16, %s20
        $region52: #{tpu_custom_call.1} parent=47 // pred_fallthru
          _
      $region48: #{tpu_custom_call.1} parent=5 // pred_fallthru
        _
      %p322 = scmp.le.s32.totalorder 1, %s20
      %p323 = scmp.lt.s32.totalorder %s20, 3
      %p324 = pnand %p322, %p323
      %p325 = pneg %p324
      // Predicated region
      $region53: #{tpu_custom_call.1} parent=5 // pred_check
        _
      $region54: #{tpu_custom_call.1} parent=5 // pred_check_branch
        %327 = sbr.rel (%p324) target = $region56
      $region55: #{tpu_custom_call.1} parent=5 // pred_region
        %s328 = ssub.s32 %s20, 1
        // Predicated region
        $region57: #{tpu_custom_call.1} parent=55 // pred_check
          %p329 = pneg %p67
        $region58: #{tpu_custom_call.1} parent=55 // pred_check_branch
          %331 = sbr.rel (%p329) target = $region60
        $region59: #{tpu_custom_call.1} parent=55 // pred_region
          %332 = dma.done [#allocation3], 1024
        $region60: #{tpu_custom_call.1} parent=55 // pred_fallthru
          _
        // Predicated region
        $region61: #{tpu_custom_call.1} parent=55 // pred_check
          %p333 = pneg %p109
        $region62: #{tpu_custom_call.1} parent=55 // pred_check_branch
          %335 = sbr.rel (%p333) target = $region64
        $region63: #{tpu_custom_call.1} parent=55 // pred_region
          %336 = dma.done [#allocation6], 1024
        $region64: #{tpu_custom_call.1} parent=55 // pred_fallthru
          _
        // Predicated region
        $region65: #{tpu_custom_call.1} parent=55 // pred_check
          %p337 = pneg %p151
        $region66: #{tpu_custom_call.1} parent=55 // pred_check_branch
          %339 = sbr.rel (%p337) target = $region68
        $region67: #{tpu_custom_call.1} parent=55 // pred_region
          %340 = dma.done [#allocation6], 1024
        $region68: #{tpu_custom_call.1} parent=55 // pred_fallthru
          _
        %s341 = smul.u32 16, %s25
        %p342 = scmp.lt.s32.totalorder %s341, 31
        %s343 = scalar_select %p342, %s341, 31
        %s344 = smul.addr %s343, 4
        %s345 = scalar_lea.vmem %s0, %s344
        %p346 = pneg %p46
        %p347 = pneg %p43
        %p348 = pneg %p67
        %p349 = pneg %p64
        %p350 = pneg %p88
        %p351 = pneg %p85
        %p352 = pneg %p109
        %p353 = pneg %p106
        %p354 = pneg %p130
        %p355 = pneg %p127
        %p356 = pneg %p151
        %p357 = pneg %p148
        %p358 = pneg %p172
        %p359 = pneg %p169
        %p360 = pneg %p193
        %p361 = pneg %p190
        %p362 = pneg %p214
        %p363 = pneg %p211
        %p364 = pneg %p240
        %p365 = pneg %p237
        %s366 = sand.u32 %s227, 1
        %s367 = scalar_lea.sflag [#allocation4], %s366
        %s368 = sand.u32 %s227, 1
        %s369 = smul.addr %s368, 128
        %s370 = scalar_lea.vmem [#allocation8], %s369
        %s371 = smul.u32 16, %s25
        %p372 = scmp.lt.s32.totalorder %s371, 31
        %s373 = scalar_select %p372, %s371, 31
        %s374 = smul.addr %s373, 4
        %s375 = scalar_lea.vmem %s0, %s374
        %s376 = smul.u32 16, %s25
        %s377 = smul.u32 16, %s25
        %v379 = vld [vmem:[%s375] sm:$0xf]
        %v380 = vld [vmem:[%s375 + $0x4] sm:$0xf]
        %v381 = vld [vmem:[%s375 + $0x8] sm:$0xf]
        %v382 = vld [vmem:[%s375 + $0xc] sm:$0xf]
        %v383 = vld [vmem:[%s375 + $0x10] sm:$0xf]
        %v384 = vld [vmem:[%s375 + $0x14] sm:$0xf]
        %v385 = vld [vmem:[%s375 + $0x18] sm:$0xf]
        %v386 = vld [vmem:[%s375 + $0x1c] sm:$0xf]
        %v387 = vld [vmem:[%s375 + $0x20] sm:$0xf]
        %v388 = vld [vmem:[%s375 + $0x24] sm:$0xf]
        %v389 = vld [vmem:[%s375 + $0x28] sm:$0xf]
        %v390 = vld [vmem:[%s375 + $0x2c] sm:$0xf]
        %v391 = vld [vmem:[%s375 + $0x30] sm:$0xf]
        %v392 = vld [vmem:[%s375 + $0x34] sm:$0xf]
        %v393 = vld [vmem:[%s375 + $0x38] sm:$0xf]
        %v394 = vld [vmem:[%s375 + $0x3c] sm:$0xf]
        %v395 = vld [vmem:[#allocation2] sm:$0xf]
        %v396 = vld [vmem:[#allocation2 + $0x4] sm:$0xf]
        %v397 = vld [vmem:[#allocation2 + $0x8] sm:$0xf]
        %v398 = vld [vmem:[#allocation2 + $0xc] sm:$0xf]
        %v399 = vld [vmem:[#allocation2 + $0x10] sm:$0xf]
        %v400 = vld [vmem:[#allocation2 + $0x14] sm:$0xf]
        %v401 = vld [vmem:[#allocation2 + $0x18] sm:$0xf]
        %v402 = vld [vmem:[#allocation2 + $0x1c] sm:$0xf]
        %v403 = vld [vmem:[#allocation2 + $0x20] sm:$0xf]
        %v404 = vld [vmem:[#allocation2 + $0x24] sm:$0xf]
        %v405 = vld [vmem:[#allocation2 + $0x28] sm:$0xf]
        %v406 = vld [vmem:[#allocation2 + $0x2c] sm:$0xf]
        %v407 = vld [vmem:[#allocation2 + $0x30] sm:$0xf]
        %v408 = vld [vmem:[#allocation2 + $0x34] sm:$0xf]
        %v409 = vld [vmem:[#allocation2 + $0x38] sm:$0xf]
        %v410 = vld [vmem:[#allocation2 + $0x3c] sm:$0xf]
        %v411 = vld [vmem:[%s2] sm:$0x1]
        %v413 = vlaneseq
        %v414 = vshrl.u32 %v413, 7
        %v415 = vsub.s32 0, %v414
        %v416 = vrot.slane %v411, %v415
        %v434 = vunpack.c.l.b16 %v379
        %v435 = vunpack.c.l.b16 %v380
        %v436 = vunpack.c.l.b16 %v381
        %v437 = vunpack.c.l.b16 %v382
        %v438 = vunpack.c.l.b16 %v383
        %v439 = vunpack.c.l.b16 %v384
        %v440 = vunpack.c.l.b16 %v385
        %v441 = vunpack.c.l.b16 %v386
        %v442 = vunpack.c.l.b16 %v387
        %v443 = vunpack.c.l.b16 %v388
        %v444 = vunpack.c.l.b16 %v389
        %v445 = vunpack.c.l.b16 %v390
        %v446 = vunpack.c.l.b16 %v391
        %v447 = vunpack.c.l.b16 %v392
        %v448 = vunpack.c.l.b16 %v393
        %v449 = vunpack.c.l.b16 %v394
        %v450 = vpack.c.b16 %v435, %v434
        %v451 = vpack.c.b16 %v437, %v436
        %v452 = vpack.c.b16 %v439, %v438
        %v453 = vpack.c.b16 %v441, %v440
        %v454 = vpack.c.b16 %v443, %v442
        %v455 = vpack.c.b16 %v445, %v444
        %v456 = vpack.c.b16 %v447, %v446
        %v457 = vpack.c.b16 %v449, %v448
        %v482 = vunpack.c.l.b16 %v395
        %v483 = vunpack.c.l.b16 %v396
        %v484 = vunpack.c.l.b16 %v397
        %v485 = vunpack.c.l.b16 %v398
        %v486 = vunpack.c.l.b16 %v399
        %v487 = vunpack.c.l.b16 %v400
        %v488 = vunpack.c.l.b16 %v401
        %v489 = vunpack.c.l.b16 %v402
        %v490 = vunpack.c.l.b16 %v403
        %v491 = vunpack.c.l.b16 %v404
        %v492 = vunpack.c.l.b16 %v405
        %v493 = vunpack.c.l.b16 %v406
        %v494 = vunpack.c.l.b16 %v407
        %v495 = vunpack.c.l.b16 %v408
        %v496 = vunpack.c.l.b16 %v409
        %v497 = vunpack.c.l.b16 %v410
        %v498 = vpack.c.b16 %v483, %v482
        %v499 = vpack.c.b16 %v485, %v484
        %v500 = vpack.c.b16 %v487, %v486
        %v501 = vpack.c.b16 %v489, %v488
        %v502 = vpack.c.b16 %v491, %v490
        %v503 = vpack.c.b16 %v493, %v492
        %v504 = vpack.c.b16 %v495, %v494
        %v505 = vpack.c.b16 %v497, %v496
        %514 = vmatprep.subr.bf16.mxu0 0
        %515 = vmatpush1.bf16.msra.mxu0 %v498
        %516 = vmatprep.subr.bf16.mxu0 0
        %517 = vmatpush1.bf16.msra.mxu0 %v499
        %518 = vmatprep.subr.bf16.mxu0 0
        %519 = vmatpush1.bf16.msra.mxu0 %v500
        %520 = vmatprep.subr.bf16.mxu0 0
        %521 = vmatpush1.bf16.msra.mxu0 %v501
        %522 = vmatprep.subr.bf16.mxu0 0
        %523 = vmatpush1.bf16.msra.mxu0 %v502
        %524 = vmatprep.subr.bf16.mxu0 0
        %525 = vmatpush1.bf16.msra.mxu0 %v503
        %526 = vmatprep.subr.bf16.mxu0 0
        %527 = vmatpush1.bf16.msra.mxu0 %v504
        %528 = vmatprep.subr.bf16.mxu0 0
        %529 = vmatpush1.bf16.msra.mxu0 %v505
        %530 = vmatprep.subr.bf16.mxu0 0
        %531 = vmatpush1.bf16.msra.mxu0 0
        %532 = vmatprep.subr.bf16.mxu0 0
        %533 = vmatpush1.bf16.msra.mxu0 0
        %534 = vmatprep.subr.bf16.mxu0 0
        %535 = vmatpush1.bf16.msra.mxu0 0
        %536 = vmatprep.subr.bf16.mxu0 0
        %537 = vmatpush1.bf16.msra.mxu0 0
        %538 = vmatprep.subr.bf16.mxu0 0
        %539 = vmatpush1.bf16.msra.mxu0 0
        %540 = vmatprep.subr.bf16.mxu0 0
        %541 = vmatpush1.bf16.msra.mxu0 0
        %542 = vmatprep.subr.bf16.mxu0 0
        %543 = vmatpush1.bf16.msra.mxu0 0
        %544 = vmatprep.subr.bf16.mxu0 0
        %545 = vmatpush1.bf16.msra.mxu0 0
        %546 = vmatprep.mubr.bf16.mxu0 0
        %547 = vmatmul.mubr.bf16.gmra.mrb[0].mxu0 %v450
        %v548 = vpop.f32.mrb[0].mxu0
        %v549 = vadd.f32 %v416, %v548
        %v550 = vpop.f32.mrb[0].mxu0
        %v551 = vpop.f32.mrb[0].mxu0
        %v552 = vadd.f32 %v416, %v551
        %v553 = vpop.f32.mrb[0].mxu0
        %554 = vmatprep.mubr.bf16.mxu0 0
        %555 = vmatmul.mubr.bf16.gmra.mrb[0].mxu0 %v451
        %v556 = vpop.f32.mrb[0].mxu0
        %v557 = vadd.f32 %v416, %v556
        %v558 = vpop.f32.mrb[0].mxu0
        %v559 = vpop.f32.mrb[0].mxu0
        %v560 = vadd.f32 %v416, %v559
        %v561 = vpop.f32.mrb[0].mxu0
        %562 = vmatprep.mubr.bf16.mxu0 0
        %563 = vmatmul.mubr.bf16.gmra.mrb[0].mxu0 %v452
        %v564 = vpop.f32.mrb[0].mxu0
        %v565 = vadd.f32 %v416, %v564
        %v566 = vpop.f32.mrb[0].mxu0
        %v567 = vpop.f32.mrb[0].mxu0
        %v568 = vadd.f32 %v416, %v567
        %v569 = vpop.f32.mrb[0].mxu0
        %570 = vmatprep.mubr.bf16.mxu0 0
        %571 = vmatmul.mubr.bf16.gmra.mrb[0].mxu0 %v453
        %v572 = vpop.f32.mrb[0].mxu0
        %v573 = vadd.f32 %v416, %v572
        %v574 = vpop.f32.mrb[0].mxu0
        %v575 = vpop.f32.mrb[0].mxu0
        %v576 = vadd.f32 %v416, %v575
        %v577 = vpop.f32.mrb[0].mxu0
        %578 = vmatprep.mubr.bf16.mxu0 0
        %579 = vmatmul.mubr.bf16.gmra.mrb[0].mxu0 %v454
        %v580 = vpop.f32.mrb[0].mxu0
        %v581 = vadd.f32 %v416, %v580
        %v582 = vpop.f32.mrb[0].mxu0
        %v583 = vpop.f32.mrb[0].mxu0
        %v584 = vadd.f32 %v416, %v583
        %v585 = vpop.f32.mrb[0].mxu0
        %586 = vmatprep.mubr.bf16.mxu0 0
        %587 = vmatmul.mubr.bf16.gmra.mrb[0].mxu0 %v455
        %v588 = vpop.f32.mrb[0].mxu0
        %v589 = vadd.f32 %v416, %v588
        %v590 = vpop.f32.mrb[0].mxu0
        %v591 = vpop.f32.mrb[0].mxu0
        %v592 = vadd.f32 %v416, %v591
        %v593 = vpop.f32.mrb[0].mxu0
        %594 = vmatprep.mubr.bf16.mxu0 0
        %595 = vmatmul.mubr.bf16.gmra.mrb[0].mxu0 %v456
        %v596 = vpop.f32.mrb[0].mxu0
        %v597 = vadd.f32 %v416, %v596
        %v598 = vpop.f32.mrb[0].mxu0
        %v599 = vpop.f32.mrb[0].mxu0
        %v600 = vadd.f32 %v416, %v599
        %v601 = vpop.f32.mrb[0].mxu0
        %602 = vmatprep.mubr.bf16.mxu0 0
        %603 = vmatmul.mubr.bf16.gmra.mrb[0].mxu0 %v457
        %v604 = vpop.f32.mrb[0].mxu0
        %v605 = vadd.f32 %v416, %v604
        %v606 = vpop.f32.mrb[0].mxu0
        %v607 = vpop.f32.mrb[0].mxu0
        %v608 = vadd.f32 %v416, %v607
        %v609 = vpop.f32.mrb[0].mxu0
        %610 = vdwg.mxu0
        %v611 = vmax.f32 %v549, 0.0
        %v612 = vmax.f32 %v552, 0.0
        %v613 = vmax.f32 %v557, 0.0
        %v614 = vmax.f32 %v560, 0.0
        %v615 = vmax.f32 %v565, 0.0
        %v616 = vmax.f32 %v568, 0.0
        %v617 = vmax.f32 %v573, 0.0
        %v618 = vmax.f32 %v576, 0.0
        %v619 = vmax.f32 %v581, 0.0
        %v620 = vmax.f32 %v584, 0.0
        %v621 = vmax.f32 %v589, 0.0
        %v622 = vmax.f32 %v592, 0.0
        %v623 = vmax.f32 %v597, 0.0
        %v624 = vmax.f32 %v600, 0.0
        %v625 = vmax.f32 %v605, 0.0
        %v626 = vmax.f32 %v608, 0.0
        %v627 = vpack.c.bf16 %v612, %v611
        %v628 = vpack.c.bf16 %v614, %v613
        %v629 = vpack.c.bf16 %v616, %v615
        %v630 = vpack.c.bf16 %v618, %v617
        %v631 = vpack.c.bf16 %v620, %v619
        %v632 = vpack.c.bf16 %v622, %v621
        %v633 = vpack.c.bf16 %v624, %v623
        %v634 = vpack.c.bf16 %v626, %v625
        %v635 = vld [vmem:[#allocation5] sm:$0xf]
        %v636 = vld [vmem:[#allocation5 + $0x4] sm:$0xf]
        %v637 = vld [vmem:[#allocation5 + $0x8] sm:$0xf]
        %v638 = vld [vmem:[#allocation5 + $0xc] sm:$0xf]
        %v639 = vld [vmem:[#allocation5 + $0x10] sm:$0xf]
        %v640 = vld [vmem:[#allocation5 + $0x14] sm:$0xf]
        %v641 = vld [vmem:[#allocation5 + $0x18] sm:$0xf]
        %v642 = vld [vmem:[#allocation5 + $0x1c] sm:$0xf]
        %v643 = vld [vmem:[#allocation5 + $0x20] sm:$0xf]
        %v644 = vld [vmem:[#allocation5 + $0x24] sm:$0xf]
        %v645 = vld [vmem:[#allocation5 + $0x28] sm:$0xf]
        %v646 = vld [vmem:[#allocation5 + $0x2c] sm:$0xf]
        %v647 = vld [vmem:[#allocation5 + $0x30] sm:$0xf]
        %v648 = vld [vmem:[#allocation5 + $0x34] sm:$0xf]
        %v649 = vld [vmem:[#allocation5 + $0x38] sm:$0xf]
        %v650 = vld [vmem:[#allocation5 + $0x3c] sm:$0xf]
        %v651 = vld [vmem:[%s4] sm:$0x1]
        %v653 = vlaneseq
        %v654 = vshrl.u32 %v653, 7
        %v655 = vsub.s32 0, %v654
        %v656 = vrot.slane %v651, %v655
        %v674 = vunpack.c.l.b16 %v635
        %v675 = vunpack.c.l.b16 %v636
        %v676 = vunpack.c.l.b16 %v637
        %v677 = vunpack.c.l.b16 %v638
        %v678 = vunpack.c.l.b16 %v639
        %v679 = vunpack.c.l.b16 %v640
        %v680 = vunpack.c.l.b16 %v641
        %v681 = vunpack.c.l.b16 %v642
        %v682 = vunpack.c.l.b16 %v643
        %v683 = vunpack.c.l.b16 %v644
        %v684 = vunpack.c.l.b16 %v645
        %v685 = vunpack.c.l.b16 %v646
        %v686 = vunpack.c.l.b16 %v647
        %v687 = vunpack.c.l.b16 %v648
        %v688 = vunpack.c.l.b16 %v649
        %v689 = vunpack.c.l.b16 %v650
        %v690 = vpack.c.b16 %v675, %v674
        %v691 = vpack.c.b16 %v677, %v676
        %v692 = vpack.c.b16 %v679, %v678
        %v693 = vpack.c.b16 %v681, %v680
        %v694 = vpack.c.b16 %v683, %v682
        %v695 = vpack.c.b16 %v685, %v684
        %v696 = vpack.c.b16 %v687, %v686
        %v697 = vpack.c.b16 %v689, %v688
        %706 = vmatprep.subr.bf16.mxu0 0
        %707 = vmatpush1.bf16.msra.mxu0 %v690
        %708 = vmatprep.subr.bf16.mxu0 0
        %709 = vmatpush1.bf16.msra.mxu0 %v691
        %710 = vmatprep.subr.bf16.mxu0 0
        %711 = vmatpush1.bf16.msra.mxu0 %v692
        %712 = vmatprep.subr.bf16.mxu0 0
        %713 = vmatpush1.bf16.msra.mxu0 %v693
        %714 = vmatprep.subr.bf16.mxu0 0
        %715 = vmatpush1.bf16.msra.mxu0 %v694
        %716 = vmatprep.subr.bf16.mxu0 0
        %717 = vmatpush1.bf16.msra.mxu0 %v695
        %718 = vmatprep.subr.bf16.mxu0 0
        %719 = vmatpush1.bf16.msra.mxu0 %v696
        %720 = vmatprep.subr.bf16.mxu0 0
        %721 = vmatpush1.bf16.msra.mxu0 %v697
        %722 = vmatprep.subr.bf16.mxu0 0
        %723 = vmatpush1.bf16.msra.mxu0 0
        %724 = vmatprep.subr.bf16.mxu0 0
        %725 = vmatpush1.bf16.msra.mxu0 0
        %726 = vmatprep.subr.bf16.mxu0 0
        %727 = vmatpush1.bf16.msra.mxu0 0
        %728 = vmatprep.subr.bf16.mxu0 0
        %729 = vmatpush1.bf16.msra.mxu0 0
        %730 = vmatprep.subr.bf16.mxu0 0
        %731 = vmatpush1.bf16.msra.mxu0 0
        %732 = vmatprep.subr.bf16.mxu0 0
        %733 = vmatpush1.bf16.msra.mxu0 0
        %734 = vmatprep.subr.bf16.mxu0 0
        %735 = vmatpush1.bf16.msra.mxu0 0
        %736 = vmatprep.subr.bf16.mxu0 0
        %737 = vmatpush1.bf16.msra.mxu0 0
        %738 = vmatprep.mubr.bf16.mxu0 0
        %739 = vmatmul.mubr.bf16.gmra.mrb[0].mxu0 %v627
        %v740 = vpop.f32.mrb[0].mxu0
        %v741 = vadd.f32 %v656, %v740
        %v742 = vpop.f32.mrb[0].mxu0
        %v743 = vpop.f32.mrb[0].mxu0
        %v744 = vadd.f32 %v656, %v743
        %v745 = vpop.f32.mrb[0].mxu0
        %746 = vmatprep.mubr.bf16.mxu0 0
        %747 = vmatmul.mubr.bf16.gmra.mrb[0].mxu0 %v628
        %v748 = vpop.f32.mrb[0].mxu0
        %v749 = vadd.f32 %v656, %v748
        %v750 = vpop.f32.mrb[0].mxu0
        %v751 = vpop.f32.mrb[0].mxu0
        %v752 = vadd.f32 %v656, %v751
        %v753 = vpop.f32.mrb[0].mxu0
        %754 = vmatprep.mubr.bf16.mxu0 0
        %755 = vmatmul.mubr.bf16.gmra.mrb[0].mxu0 %v629
        %v756 = vpop.f32.mrb[0].mxu0
        %v757 = vadd.f32 %v656, %v756
        %v758 = vpop.f32.mrb[0].mxu0
        %v759 = vpop.f32.mrb[0].mxu0
        %v760 = vadd.f32 %v656, %v759
        %v761 = vpop.f32.mrb[0].mxu0
        %762 = vmatprep.mubr.bf16.mxu0 0
        %763 = vmatmul.mubr.bf16.gmra.mrb[0].mxu0 %v630
        %v764 = vpop.f32.mrb[0].mxu0
        %v765 = vadd.f32 %v656, %v764
        %v766 = vpop.f32.mrb[0].mxu0
        %v767 = vpop.f32.mrb[0].mxu0
        %v768 = vadd.f32 %v656, %v767
        %v769 = vpop.f32.mrb[0].mxu0
        %770 = vmatprep.mubr.bf16.mxu0 0
        %771 = vmatmul.mubr.bf16.gmra.mrb[0].mxu0 %v631
        %v772 = vpop.f32.mrb[0].mxu0
        %v773 = vadd.f32 %v656, %v772
        %v774 = vpop.f32.mrb[0].mxu0
        %v775 = vpop.f32.mrb[0].mxu0
        %v776 = vadd.f32 %v656, %v775
        %v777 = vpop.f32.mrb[0].mxu0
        %778 = vmatprep.mubr.bf16.mxu0 0
        %779 = vmatmul.mubr.bf16.gmra.mrb[0].mxu0 %v632
        %v780 = vpop.f32.mrb[0].mxu0
        %v781 = vadd.f32 %v656, %v780
        %v782 = vpop.f32.mrb[0].mxu0
        %v783 = vpop.f32.mrb[0].mxu0
        %v784 = vadd.f32 %v656, %v783
        %v785 = vpop.f32.mrb[0].mxu0
        %786 = vmatprep.mubr.bf16.mxu0 0
        %787 = vmatmul.mubr.bf16.gmra.mrb[0].mxu0 %v633
        %v788 = vpop.f32.mrb[0].mxu0
        %v789 = vadd.f32 %v656, %v788
        %v790 = vpop.f32.mrb[0].mxu0
        %v791 = vpop.f32.mrb[0].mxu0
        %v792 = vadd.f32 %v656, %v791
        %v793 = vpop.f32.mrb[0].mxu0
        %794 = vmatprep.mubr.bf16.mxu0 0
        %795 = vmatmul.mubr.bf16.gmra.mrb[0].mxu0 %v634
        %v796 = vpop.f32.mrb[0].mxu0
        %v797 = vadd.f32 %v656, %v796
        %v798 = vpop.f32.mrb[0].mxu0
        %v799 = vpop.f32.mrb[0].mxu0
        %v800 = vadd.f32 %v656, %v799
        %v801 = vpop.f32.mrb[0].mxu0
        %802 = vdwg.mxu0
        %v803 = vmax.f32 %v741, 0.0
        %v804 = vmax.f32 %v744, 0.0
        %v805 = vmax.f32 %v749, 0.0
        %v806 = vmax.f32 %v752, 0.0
        %v807 = vmax.f32 %v757, 0.0
        %v808 = vmax.f32 %v760, 0.0
        %v809 = vmax.f32 %v765, 0.0
        %v810 = vmax.f32 %v768, 0.0
        %v811 = vmax.f32 %v773, 0.0
        %v812 = vmax.f32 %v776, 0.0
        %v813 = vmax.f32 %v781, 0.0
        %v814 = vmax.f32 %v784, 0.0
        %v815 = vmax.f32 %v789, 0.0
        %v816 = vmax.f32 %v792, 0.0
        %v817 = vmax.f32 %v797, 0.0
        %v818 = vmax.f32 %v800, 0.0
        %v819 = vpack.c.bf16 %v804, %v803
        %v820 = vpack.c.bf16 %v806, %v805
        %v821 = vpack.c.bf16 %v808, %v807
        %v822 = vpack.c.bf16 %v810, %v809
        %v823 = vpack.c.bf16 %v812, %v811
        %v824 = vpack.c.bf16 %v814, %v813
        %v825 = vpack.c.bf16 %v816, %v815
        %v826 = vpack.c.bf16 %v818, %v817
        %v827 = vld [vmem:[#allocation7] sm:$0xf]
        %v828 = vld [vmem:[#allocation7 + $0x4] sm:$0xf]
        %v829 = vld [vmem:[#allocation7 + $0x8] sm:$0xf]
        %v830 = vld [vmem:[#allocation7 + $0xc] sm:$0xf]
        %v831 = vld [vmem:[#allocation7 + $0x10] sm:$0xf]
        %v832 = vld [vmem:[#allocation7 + $0x14] sm:$0xf]
        %v833 = vld [vmem:[#allocation7 + $0x18] sm:$0xf]
        %v834 = vld [vmem:[#allocation7 + $0x1c] sm:$0xf]
        %v835 = vld [vmem:[#allocation7 + $0x20] sm:$0xf]
        %v836 = vld [vmem:[#allocation7 + $0x24] sm:$0xf]
        %v837 = vld [vmem:[#allocation7 + $0x28] sm:$0xf]
        %v838 = vld [vmem:[#allocation7 + $0x2c] sm:$0xf]
        %v839 = vld [vmem:[#allocation7 + $0x30] sm:$0xf]
        %v840 = vld [vmem:[#allocation7 + $0x34] sm:$0xf]
        %v841 = vld [vmem:[#allocation7 + $0x38] sm:$0xf]
        %v842 = vld [vmem:[#allocation7 + $0x3c] sm:$0xf]
        %v843 = vld [vmem:[%s6] sm:$0x1]
        %v845 = vlaneseq
        %v846 = vshrl.u32 %v845, 7
        %v847 = vsub.s32 0, %v846
        %v848 = vrot.slane %v843, %v847
        %v866 = vunpack.c.l.b16 %v827
        %v867 = vunpack.c.l.b16 %v828
        %v868 = vunpack.c.l.b16 %v829
        %v869 = vunpack.c.l.b16 %v830
        %v870 = vunpack.c.l.b16 %v831
        %v871 = vunpack.c.l.b16 %v832
        %v872 = vunpack.c.l.b16 %v833
        %v873 = vunpack.c.l.b16 %v834
        %v874 = vunpack.c.l.b16 %v835
        %v875 = vunpack.c.l.b16 %v836
        %v876 = vunpack.c.l.b16 %v837
        %v877 = vunpack.c.l.b16 %v838
        %v878 = vunpack.c.l.b16 %v839
        %v879 = vunpack.c.l.b16 %v840
        %v880 = vunpack.c.l.b16 %v841
        %v881 = vunpack.c.l.b16 %v842
        %v882 = vpack.c.b16 %v867, %v866
        %v883 = vpack.c.b16 %v869, %v868
        %v884 = vpack.c.b16 %v871, %v870
        %v885 = vpack.c.b16 %v873, %v872
        %v886 = vpack.c.b16 %v875, %v874
        %v887 = vpack.c.b16 %v877, %v876
        %v888 = vpack.c.b16 %v879, %v878
        %v889 = vpack.c.b16 %v881, %v880
        %898 = vmatprep.subr.bf16.mxu0 0
        %899 = vmatpush1.bf16.msra.mxu0 %v882
        %900 = vmatprep.subr.bf16.mxu0 0
        %901 = vmatpush1.bf16.msra.mxu0 %v883
        %902 = vmatprep.subr.bf16.mxu0 0
        %903 = vmatpush1.bf16.msra.mxu0 %v884
        %904 = vmatprep.subr.bf16.mxu0 0
        %905 = vmatpush1.bf16.msra.mxu0 %v885
        %906 = vmatprep.subr.bf16.mxu0 0
        %907 = vmatpush1.bf16.msra.mxu0 %v886
        %908 = vmatprep.subr.bf16.mxu0 0
        %909 = vmatpush1.bf16.msra.mxu0 %v887
        %910 = vmatprep.subr.bf16.mxu0 0
        %911 = vmatpush1.bf16.msra.mxu0 %v888
        %912 = vmatprep.subr.bf16.mxu0 0
        %913 = vmatpush1.bf16.msra.mxu0 %v889
        %914 = vmatprep.subr.bf16.mxu0 0
        %915 = vmatpush1.bf16.msra.mxu0 0
        %916 = vmatprep.subr.bf16.mxu0 0
        %917 = vmatpush1.bf16.msra.mxu0 0
        %918 = vmatprep.subr.bf16.mxu0 0
        %919 = vmatpush1.bf16.msra.mxu0 0
        %920 = vmatprep.subr.bf16.mxu0 0
        %921 = vmatpush1.bf16.msra.mxu0 0
        %922 = vmatprep.subr.bf16.mxu0 0
        %923 = vmatpush1.bf16.msra.mxu0 0
        %924 = vmatprep.subr.bf16.mxu0 0
        %925 = vmatpush1.bf16.msra.mxu0 0
        %926 = vmatprep.subr.bf16.mxu0 0
        %927 = vmatpush1.bf16.msra.mxu0 0
        %928 = vmatprep.subr.bf16.mxu0 0
        %929 = vmatpush1.bf16.msra.mxu0 0
        %930 = vmatprep.mubr.bf16.mxu0 0
        %931 = vmatmul.mubr.bf16.gmra.mrb[0].mxu0 %v819
        %v932 = vpop.f32.mrb[0].mxu0
        %v933 = vadd.f32 %v848, %v932
        %v934 = vpop.f32.mrb[0].mxu0
        %v935 = vpop.f32.mrb[0].mxu0
        %v936 = vadd.f32 %v848, %v935
        %v937 = vpop.f32.mrb[0].mxu0
        %938 = vmatprep.mubr.bf16.mxu0 0
        %939 = vmatmul.mubr.bf16.gmra.mrb[0].mxu0 %v820
        %v940 = vpop.f32.mrb[0].mxu0
        %v941 = vadd.f32 %v848, %v940
        %v942 = vpop.f32.mrb[0].mxu0
        %v943 = vpop.f32.mrb[0].mxu0
        %v944 = vadd.f32 %v848, %v943
        %v945 = vpop.f32.mrb[0].mxu0
        %946 = vmatprep.mubr.bf16.mxu0 0
        %947 = vmatmul.mubr.bf16.gmra.mrb[0].mxu0 %v821
        %v948 = vpop.f32.mrb[0].mxu0
        %v949 = vadd.f32 %v848, %v948
        %v950 = vpop.f32.mrb[0].mxu0
        %v951 = vpop.f32.mrb[0].mxu0
        %v952 = vadd.f32 %v848, %v951
        %v953 = vpop.f32.mrb[0].mxu0
        %954 = vmatprep.mubr.bf16.mxu0 0
        %955 = vmatmul.mubr.bf16.gmra.mrb[0].mxu0 %v822
        %v956 = vpop.f32.mrb[0].mxu0
        %v957 = vadd.f32 %v848, %v956
        %v958 = vpop.f32.mrb[0].mxu0
        %v959 = vpop.f32.mrb[0].mxu0
        %v960 = vadd.f32 %v848, %v959
        %v961 = vpop.f32.mrb[0].mxu0
        %962 = vmatprep.mubr.bf16.mxu0 0
        %963 = vmatmul.mubr.bf16.gmra.mrb[0].mxu0 %v823
        %v964 = vpop.f32.mrb[0].mxu0
        %v965 = vadd.f32 %v848, %v964
        %v966 = vpop.f32.mrb[0].mxu0
        %v967 = vpop.f32.mrb[0].mxu0
        %v968 = vadd.f32 %v848, %v967
        %v969 = vpop.f32.mrb[0].mxu0
        %970 = vmatprep.mubr.bf16.mxu0 0
        %971 = vmatmul.mubr.bf16.gmra.mrb[0].mxu0 %v824
        %v972 = vpop.f32.mrb[0].mxu0
        %v973 = vadd.f32 %v848, %v972
        %v974 = vpop.f32.mrb[0].mxu0
        %v975 = vpop.f32.mrb[0].mxu0
        %v976 = vadd.f32 %v848, %v975
        %v977 = vpop.f32.mrb[0].mxu0
        %978 = vmatprep.mubr.bf16.mxu0 0
        %979 = vmatmul.mubr.bf16.gmra.mrb[0].mxu0 %v825
        %v980 = vpop.f32.mrb[0].mxu0
        %v981 = vadd.f32 %v848, %v980
        %v982 = vpop.f32.mrb[0].mxu0
        %v983 = vpop.f32.mrb[0].mxu0
        %v984 = vadd.f32 %v848, %v983
        %v985 = vpop.f32.mrb[0].mxu0
        %986 = vmatprep.mubr.bf16.mxu0 0
        %987 = vmatmul.mubr.bf16.gmra.mrb[0].mxu0 %v826
        %v988 = vpop.f32.mrb[0].mxu0
        %v989 = vadd.f32 %v848, %v988
        %v990 = vpop.f32.mrb[0].mxu0
        %v991 = vpop.f32.mrb[0].mxu0
        %v992 = vadd.f32 %v848, %v991
        %v993 = vpop.f32.mrb[0].mxu0
        %994 = vdwg.mxu0
        %995 = vmax.xlane.f32.xlu0 %v933
        %v996 = vpop.xlane.xlu0 %995
        %997 = vmax.xlane.f32.xlu0 %v936
        %v998 = vpop.xlane.xlu0 %997
        %999 = vmax.xlane.f32.xlu0 %v941
        %v1000 = vpop.xlane.xlu0 %999
        %1001 = vmax.xlane.f32.xlu0 %v944
        %v1002 = vpop.xlane.xlu0 %1001
        %1003 = vmax.xlane.f32.xlu0 %v949
        %v1004 = vpop.xlane.xlu0 %1003
        %1005 = vmax.xlane.f32.xlu0 %v952
        %v1006 = vpop.xlane.xlu0 %1005
        %1007 = vmax.xlane.f32.xlu0 %v957
        %v1008 = vpop.xlane.xlu0 %1007
        %1009 = vmax.xlane.f32.xlu0 %v960
        %v1010 = vpop.xlane.xlu0 %1009
        %1011 = vmax.xlane.f32.xlu0 %v965
        %v1012 = vpop.xlane.xlu0 %1011
        %1013 = vmax.xlane.f32.xlu0 %v968
        %v1014 = vpop.xlane.xlu0 %1013
        %1015 = vmax.xlane.f32.xlu0 %v973
        %v1016 = vpop.xlane.xlu0 %1015
        %1017 = vmax.xlane.f32.xlu0 %v976
        %v1018 = vpop.xlane.xlu0 %1017
        %1019 = vmax.xlane.f32.xlu0 %v981
        %v1020 = vpop.xlane.xlu0 %1019
        %1021 = vmax.xlane.f32.xlu0 %v984
        %v1022 = vpop.xlane.xlu0 %1021
        %1023 = vmax.xlane.f32.xlu0 %v989
        %v1024 = vpop.xlane.xlu0 %1023
        %1025 = vmax.xlane.f32.xlu0 %v992
        %v1026 = vpop.xlane.xlu0 %1025
        %v1027 = vsub.f32 %v933, %v996
        %v1028 = vsub.f32 %v936, %v998
        %v1029 = vsub.f32 %v941, %v1000
        %v1030 = vsub.f32 %v944, %v1002
        %v1031 = vsub.f32 %v949, %v1004
        %v1032 = vsub.f32 %v952, %v1006
        %v1033 = vsub.f32 %v957, %v1008
        %v1034 = vsub.f32 %v960, %v1010
        %v1035 = vsub.f32 %v965, %v1012
        %v1036 = vsub.f32 %v968, %v1014
        %v1037 = vsub.f32 %v973, %v1016
        %v1038 = vsub.f32 %v976, %v1018
        %v1039 = vsub.f32 %v981, %v1020
        %v1040 = vsub.f32 %v984, %v1022
        %v1041 = vsub.f32 %v989, %v1024
        %v1042 = vsub.f32 %v992, %v1026
        %v1043 = vmul.f32 %v1027, 1.442695
        %v1044 = vpow.pop %v1043
        %v1045 = vmul.f32 %v1028, 1.442695
        %v1046 = vpow.pop %v1045
        %v1047 = vmul.f32 %v1029, 1.442695
        %v1048 = vpow.pop %v1047
        %v1049 = vmul.f32 %v1030, 1.442695
        %v1050 = vpow.pop %v1049
        %v1051 = vmul.f32 %v1031, 1.442695
        %v1052 = vpow.pop %v1051
        %v1053 = vmul.f32 %v1032, 1.442695
        %v1054 = vpow.pop %v1053
        %v1055 = vmul.f32 %v1033, 1.442695
        %v1056 = vpow.pop %v1055
        %v1057 = vmul.f32 %v1034, 1.442695
        %v1058 = vpow.pop %v1057
        %v1059 = vmul.f32 %v1035, 1.442695
        %v1060 = vpow.pop %v1059
        %v1061 = vmul.f32 %v1036, 1.442695
        %v1062 = vpow.pop %v1061
        %v1063 = vmul.f32 %v1037, 1.442695
        %v1064 = vpow.pop %v1063
        %v1065 = vmul.f32 %v1038, 1.442695
        %v1066 = vpow.pop %v1065
        %v1067 = vmul.f32 %v1039, 1.442695
        %v1068 = vpow.pop %v1067
        %v1069 = vmul.f32 %v1040, 1.442695
        %v1070 = vpow.pop %v1069
        %v1071 = vmul.f32 %v1041, 1.442695
        %v1072 = vpow.pop %v1071
        %v1073 = vmul.f32 %v1042, 1.442695
        %v1074 = vpow.pop %v1073
        %v1075 = vld [vmem:[%s7] sm:$0xff]
        %v1076 = vld [vmem:[%s7 + $0x8] sm:$0xff]
        %v1077 = vld [vmem:[%s7 + $0x10] sm:$0xff]
        %v1078 = vld [vmem:[%s7 + $0x18] sm:$0xff]
        %v1079 = vld [vmem:[%s7 + $0x20] sm:$0xff]
        %v1080 = vld [vmem:[%s7 + $0x28] sm:$0xff]
        %v1081 = vld [vmem:[%s7 + $0x30] sm:$0xff]
        %v1082 = vld [vmem:[%s7 + $0x38] sm:$0xff]
        %v1083 = vld [vmem:[%s7 + $0x40] sm:$0xff]
        %v1084 = vld [vmem:[%s7 + $0x48] sm:$0xff]
        %v1085 = vld [vmem:[%s7 + $0x50] sm:$0xff]
        %v1086 = vld [vmem:[%s7 + $0x58] sm:$0xff]
        %v1087 = vld [vmem:[%s7 + $0x60] sm:$0xff]
        %v1088 = vld [vmem:[%s7 + $0x68] sm:$0xff]
        %v1089 = vld [vmem:[%s7 + $0x70] sm:$0xff]
        %v1090 = vld [vmem:[%s7 + $0x78] sm:$0xff]
        %1091 = vmatprep.subr.mxu0 0.0
        %1092 = vmatpush1.msra.mxu0 %v1075
        %1093 = vmatprep.subr.mxu0 0.0
        %1094 = vmatpush1.msra.mxu0 %v1076
        %1095 = vmatprep.subr.mxu0 0.0
        %1096 = vmatpush1.msra.mxu0 %v1077
        %1097 = vmatprep.subr.mxu0 0.0
        %1098 = vmatpush1.msra.mxu0 %v1078
        %1099 = vmatprep.subr.mxu0 0.0
        %1100 = vmatpush1.msra.mxu0 %v1079
        %1101 = vmatprep.subr.mxu0 0.0
        %1102 = vmatpush1.msra.mxu0 %v1080
        %1103 = vmatprep.subr.mxu0 0.0
        %1104 = vmatpush1.msra.mxu0 %v1081
        %1105 = vmatprep.subr.mxu0 0.0
        %1106 = vmatpush1.msra.mxu0 %v1082
        %1107 = vmatprep.subr.mxu0 0.0
        %1108 = vmatpush1.msra.mxu0 %v1083
        %1109 = vmatprep.subr.mxu0 0.0
        %1110 = vmatpush1.msra.mxu0 %v1084
        %1111 = vmatprep.subr.mxu0 0.0
        %1112 = vmatpush1.msra.mxu0 %v1085
        %1113 = vmatprep.subr.mxu0 0.0
        %1114 = vmatpush1.msra.mxu0 %v1086
        %1115 = vmatprep.subr.mxu0 0.0
        %1116 = vmatpush1.msra.mxu0 %v1087
        %1117 = vmatprep.subr.mxu0 0.0
        %1118 = vmatpush1.msra.mxu0 %v1088
        %1119 = vmatprep.subr.mxu0 0.0
        %1120 = vmatpush1.msra.mxu0 %v1089
        %1121 = vmatprep.subr.mxu0 0.0
        %1122 = vmatpush1.msra.mxu0 %v1090
        %1123 = vmatprep.subr.mxu0 0.0
        %1124 = vmatpush1.msra.mxu0 0.0
        %1125 = vmatprep.subr.mxu0 0.0
        %1126 = vmatpush1.msra.mxu0 0.0
        %1127 = vmatprep.subr.mxu0 0.0
        %1128 = vmatpush1.msra.mxu0 0.0
        %1129 = vmatprep.subr.mxu0 0.0
        %1130 = vmatpush1.msra.mxu0 0.0
        %1131 = vmatprep.subr.mxu0 0.0
        %1132 = vmatpush1.msra.mxu0 0.0
        %1133 = vmatprep.subr.mxu0 0.0
        %1134 = vmatpush1.msra.mxu0 0.0
        %1135 = vmatprep.subr.mxu0 0.0
        %1136 = vmatpush1.msra.mxu0 0.0
        %1137 = vmatprep.subr.mxu0 0.0
        %1138 = vmatpush1.msra.mxu0 0.0
        %1139 = vmatprep.subr.mxu0 0.0
        %1140 = vmatpush1.msra.mxu0 0.0
        %1141 = vmatprep.subr.mxu0 0.0
        %1142 = vmatpush1.msra.mxu0 0.0
        %1143 = vmatprep.subr.mxu0 0.0
        %1144 = vmatpush1.msra.mxu0 0.0
        %1145 = vmatprep.subr.mxu0 0.0
        %1146 = vmatpush1.msra.mxu0 0.0
        %1147 = vmatprep.subr.mxu0 0.0
        %1148 = vmatpush1.msra.mxu0 0.0
        %1149 = vmatprep.subr.mxu0 0.0
        %1150 = vmatpush1.msra.mxu0 0.0
        %1151 = vmatprep.subr.mxu0 0.0
        %1152 = vmatpush1.msra.mxu0 0.0
        %1153 = vmatprep.subr.mxu0 0.0
        %1154 = vmatpush1.msra.mxu0 0.0
        %1155 = vmatprep.mubr.f32.mxu0 0.0
        %1156 = vmatmul.mubr.f32.gmra.mrb[0].mxu0 %v1044
        %v1157 = vpop.f32.mrb[0].mxu0
        %v1158 = vadd.f32 0.0, %v1157
        %v1159 = vpop.f32.mrb[0].mxu0
        %1160 = vmatprep.mubr.f32.mxu0 0.0
        %1161 = vmatmul.mubr.f32.gmra.mrb[0].mxu0 %v1046
        %v1162 = vpop.f32.mrb[0].mxu0
        %v1163 = vadd.f32 0.0, %v1162
        %v1164 = vpop.f32.mrb[0].mxu0
        %1165 = vmatprep.mubr.f32.mxu0 0.0
        %1166 = vmatmul.mubr.f32.gmra.mrb[0].mxu0 %v1048
        %v1167 = vpop.f32.mrb[0].mxu0
        %v1168 = vadd.f32 0.0, %v1167
        %v1169 = vpop.f32.mrb[0].mxu0
        %1170 = vmatprep.mubr.f32.mxu0 0.0
        %1171 = vmatmul.mubr.f32.gmra.mrb[0].mxu0 %v1050
        %v1172 = vpop.f32.mrb[0].mxu0
        %v1173 = vadd.f32 0.0, %v1172
        %v1174 = vpop.f32.mrb[0].mxu0
        %1175 = vmatprep.mubr.f32.mxu0 0.0
        %1176 = vmatmul.mubr.f32.gmra.mrb[0].mxu0 %v1052
        %v1177 = vpop.f32.mrb[0].mxu0
        %v1178 = vadd.f32 0.0, %v1177
        %v1179 = vpop.f32.mrb[0].mxu0
        %1180 = vmatprep.mubr.f32.mxu0 0.0
        %1181 = vmatmul.mubr.f32.gmra.mrb[0].mxu0 %v1054
        %v1182 = vpop.f32.mrb[0].mxu0
        %v1183 = vadd.f32 0.0, %v1182
        %v1184 = vpop.f32.mrb[0].mxu0
        %1185 = vmatprep.mubr.f32.mxu0 0.0
        %1186 = vmatmul.mubr.f32.gmra.mrb[0].mxu0 %v1056
        %v1187 = vpop.f32.mrb[0].mxu0
        %v1188 = vadd.f32 0.0, %v1187
        %v1189 = vpop.f32.mrb[0].mxu0
        %1190 = vmatprep.mubr.f32.mxu0 0.0
        %1191 = vmatmul.mubr.f32.gmra.mrb[0].mxu0 %v1058
        %v1192 = vpop.f32.mrb[0].mxu0
        %v1193 = vadd.f32 0.0, %v1192
        %v1194 = vpop.f32.mrb[0].mxu0
        %1195 = vmatprep.mubr.f32.mxu0 0.0
        %1196 = vmatmul.mubr.f32.gmra.mrb[0].mxu0 %v1060
        %v1197 = vpop.f32.mrb[0].mxu0
        %v1198 = vadd.f32 0.0, %v1197
        %v1199 = vpop.f32.mrb[0].mxu0
        %1200 = vmatprep.mubr.f32.mxu0 0.0
        %1201 = vmatmul.mubr.f32.gmra.mrb[0].mxu0 %v1062
        %v1202 = vpop.f32.mrb[0].mxu0
        %v1203 = vadd.f32 0.0, %v1202
        %v1204 = vpop.f32.mrb[0].mxu0
        %1205 = vmatprep.mubr.f32.mxu0 0.0
        %1206 = vmatmul.mubr.f32.gmra.mrb[0].mxu0 %v1064
        %v1207 = vpop.f32.mrb[0].mxu0
        %v1208 = vadd.f32 0.0, %v1207
        %v1209 = vpop.f32.mrb[0].mxu0
        %1210 = vmatprep.mubr.f32.mxu0 0.0
        %1211 = vmatmul.mubr.f32.gmra.mrb[0].mxu0 %v1066
        %v1212 = vpop.f32.mrb[0].mxu0
        %v1213 = vadd.f32 0.0, %v1212
        %v1214 = vpop.f32.mrb[0].mxu0
        %1215 = vmatprep.mubr.f32.mxu0 0.0
        %1216 = vmatmul.mubr.f32.gmra.mrb[0].mxu0 %v1068
        %v1217 = vpop.f32.mrb[0].mxu0
        %v1218 = vadd.f32 0.0, %v1217
        %v1219 = vpop.f32.mrb[0].mxu0
        %1220 = vmatprep.mubr.f32.mxu0 0.0
        %1221 = vmatmul.mubr.f32.gmra.mrb[0].mxu0 %v1070
        %v1222 = vpop.f32.mrb[0].mxu0
        %v1223 = vadd.f32 0.0, %v1222
        %v1224 = vpop.f32.mrb[0].mxu0
        %1225 = vmatprep.mubr.f32.mxu0 0.0
        %1226 = vmatmul.mubr.f32.gmra.mrb[0].mxu0 %v1072
        %v1227 = vpop.f32.mrb[0].mxu0
        %v1228 = vadd.f32 0.0, %v1227
        %v1229 = vpop.f32.mrb[0].mxu0
        %1230 = vmatprep.mubr.f32.mxu0 0.0
        %1231 = vmatmul.mubr.f32.gmra.mrb[0].mxu0 %v1074
        %v1232 = vpop.f32.mrb[0].mxu0
        %v1233 = vadd.f32 0.0, %v1232
        %v1234 = vpop.f32.mrb[0].mxu0
        %1235 = vdwg.mxu0
        %v1236 = vrcp.pop %v1158
        %v1237 = vrcp.pop %v1163
        %v1238 = vrcp.pop %v1168
        %v1239 = vrcp.pop %v1173
        %v1240 = vrcp.pop %v1178
        %v1241 = vrcp.pop %v1183
        %v1242 = vrcp.pop %v1188
        %v1243 = vrcp.pop %v1193
        %v1244 = vrcp.pop %v1198
        %v1245 = vrcp.pop %v1203
        %v1246 = vrcp.pop %v1208
        %v1247 = vrcp.pop %v1213
        %v1248 = vrcp.pop %v1218
        %v1249 = vrcp.pop %v1223
        %v1250 = vrcp.pop %v1228
        %v1251 = vrcp.pop %v1233
        %v1252 = vld [vmem:[%s8] sm:$0xf]
        %vm1253 = vcmask 31744
        %v1255 = vsel %vm1253, %v1236, 0
        %v1258 = vsel %vm1253, %v1237, 0
        %v1261 = vsel %vm1253, %v1238, 0
        %v1264 = vsel %vm1253, %v1239, 0
        %v1267 = vsel %vm1253, %v1240, 0
        %v1270 = vsel %vm1253, %v1241, 0
        %v1273 = vsel %vm1253, %v1242, 0
        %v1276 = vsel %vm1253, %v1243, 0
        %v1279 = vsel %vm1253, %v1244, 0
        %v1282 = vsel %vm1253, %v1245, 0
        %v1285 = vsel %vm1253, %v1246, 0
        %v1288 = vsel %vm1253, %v1247, 0
        %v1291 = vsel %vm1253, %v1248, 0
        %v1294 = vsel %vm1253, %v1249, 0
        %v1297 = vsel %vm1253, %v1250, 0
        %v1300 = vsel %vm1253, %v1251, 0
        %vm1302 = vcmask 1043456
        %v1304 = vsel %vm1302, %v1252, 0
        %1306 = vmatprep.subr.mxu0 0.0
        %1307 = vmatpush1.msra.mxu0 %v1304
        %1308 = vmatprep.subr.mxu0 0.0
        %1309 = vmatpush1.msra.mxu0 0.0
        %1310 = vmatprep.subr.mxu0 0.0
        %1311 = vmatpush1.msra.mxu0 0.0
        %1312 = vmatprep.subr.mxu0 0.0
        %1313 = vmatpush1.msra.mxu0 0.0
        %1314 = vmatprep.subr.mxu0 0.0
        %1315 = vmatpush1.msra.mxu0 0.0
        %1316 = vmatprep.subr.mxu0 0.0
        %1317 = vmatpush1.msra.mxu0 0.0
        %1318 = vmatprep.subr.mxu0 0.0
        %1319 = vmatpush1.msra.mxu0 0.0
        %1320 = vmatprep.subr.mxu0 0.0
        %1321 = vmatpush1.msra.mxu0 0.0
        %1322 = vmatprep.subr.mxu0 0.0
        %1323 = vmatpush1.msra.mxu0 0.0
        %1324 = vmatprep.subr.mxu0 0.0
        %1325 = vmatpush1.msra.mxu0 0.0
        %1326 = vmatprep.subr.mxu0 0.0
        %1327 = vmatpush1.msra.mxu0 0.0
        %1328 = vmatprep.subr.mxu0 0.0
        %1329 = vmatpush1.msra.mxu0 0.0
        %1330 = vmatprep.subr.mxu0 0.0
        %1331 = vmatpush1.msra.mxu0 0.0
        %1332 = vmatprep.subr.mxu0 0.0
        %1333 = vmatpush1.msra.mxu0 0.0
        %1334 = vmatprep.subr.mxu0 0.0
        %1335 = vmatpush1.msra.mxu0 0.0
        %1336 = vmatprep.subr.mxu0 0.0
        %1337 = vmatpush1.msra.mxu0 0.0
        %1338 = vmatprep.subr.mxu0 0.0
        %1339 = vmatpush1.msra.mxu0 0.0
        %1340 = vmatprep.subr.mxu0 0.0
        %1341 = vmatpush1.msra.mxu0 0.0
        %1342 = vmatprep.subr.mxu0 0.0
        %1343 = vmatpush1.msra.mxu0 0.0
        %1344 = vmatprep.subr.mxu0 0.0
        %1345 = vmatpush1.msra.mxu0 0.0
        %1346 = vmatprep.subr.mxu0 0.0
        %1347 = vmatpush1.msra.mxu0 0.0
        %1348 = vmatprep.subr.mxu0 0.0
        %1349 = vmatpush1.msra.mxu0 0.0
        %1350 = vmatprep.subr.mxu0 0.0
        %1351 = vmatpush1.msra.mxu0 0.0
        %1352 = vmatprep.subr.mxu0 0.0
        %1353 = vmatpush1.msra.mxu0 0.0
        %1354 = vmatprep.subr.mxu0 0.0
        %1355 = vmatpush1.msra.mxu0 0.0
        %1356 = vmatprep.subr.mxu0 0.0
        %1357 = vmatpush1.msra.mxu0 0.0
        %1358 = vmatprep.subr.mxu0 0.0
        %1359 = vmatpush1.msra.mxu0 0.0
        %1360 = vmatprep.subr.mxu0 0.0
        %1361 = vmatpush1.msra.mxu0 0.0
        %1362 = vmatprep.subr.mxu0 0.0
        %1363 = vmatpush1.msra.mxu0 0.0
        %1364 = vmatprep.subr.mxu0 0.0
        %1365 = vmatpush1.msra.mxu0 0.0
        %1366 = vmatprep.subr.mxu0 0.0
        %1367 = vmatpush1.msra.mxu0 0.0
        %1368 = vmatprep.subr.mxu0 0.0
        %1369 = vmatpush1.msra.mxu0 0.0
        %1370 = vmatprep.mubr.f32.mxu0 0.0
        %1371 = vmatmul.mubr.f32.gmra.mrb[0].mxu0 %v1255
        %v1372 = vpop.f32.mrb[0].mxu0
        %v1373 = vadd.f32 0.0, %v1372
        %v1374 = vpop.f32.mrb[0].mxu0
        %1375 = vmatprep.mubr.f32.mxu0 0.0
        %1376 = vmatmul.mubr.f32.gmra.mrb[0].mxu0 %v1258
        %v1377 = vpop.f32.mrb[0].mxu0
        %v1378 = vadd.f32 0.0, %v1377
        %v1379 = vpop.f32.mrb[0].mxu0
        %1380 = vmatprep.mubr.f32.mxu0 0.0
        %1381 = vmatmul.mubr.f32.gmra.mrb[0].mxu0 %v1261
        %v1382 = vpop.f32.mrb[0].mxu0
        %v1383 = vadd.f32 0.0, %v1382
        %v1384 = vpop.f32.mrb[0].mxu0
        %1385 = vmatprep.mubr.f32.mxu0 0.0
        %1386 = vmatmul.mubr.f32.gmra.mrb[0].mxu0 %v1264
        %v1387 = vpop.f32.mrb[0].mxu0
        %v1388 = vadd.f32 0.0, %v1387
        %v1389 = vpop.f32.mrb[0].mxu0
        %1390 = vmatprep.mubr.f32.mxu0 0.0
        %1391 = vmatmul.mubr.f32.gmra.mrb[0].mxu0 %v1267
        %v1392 = vpop.f32.mrb[0].mxu0
        %v1393 = vadd.f32 0.0, %v1392
        %v1394 = vpop.f32.mrb[0].mxu0
        %1395 = vmatprep.mubr.f32.mxu0 0.0
        %1396 = vmatmul.mubr.f32.gmra.mrb[0].mxu0 %v1270
        %v1397 = vpop.f32.mrb[0].mxu0
        %v1398 = vadd.f32 0.0, %v1397
        %v1399 = vpop.f32.mrb[0].mxu0
        %1400 = vmatprep.mubr.f32.mxu0 0.0
        %1401 = vmatmul.mubr.f32.gmra.mrb[0].mxu0 %v1273
        %v1402 = vpop.f32.mrb[0].mxu0
        %v1403 = vadd.f32 0.0, %v1402
        %v1404 = vpop.f32.mrb[0].mxu0
        %1405 = vmatprep.mubr.f32.mxu0 0.0
        %1406 = vmatmul.mubr.f32.gmra.mrb[0].mxu0 %v1276
        %v1407 = vpop.f32.mrb[0].mxu0
        %v1408 = vadd.f32 0.0, %v1407
        %v1409 = vpop.f32.mrb[0].mxu0
        %1410 = vmatprep.mubr.f32.mxu0 0.0
        %1411 = vmatmul.mubr.f32.gmra.mrb[0].mxu0 %v1279
        %v1412 = vpop.f32.mrb[0].mxu0
        %v1413 = vadd.f32 0.0, %v1412
        %v1414 = vpop.f32.mrb[0].mxu0
        %1415 = vmatprep.mubr.f32.mxu0 0.0
        %1416 = vmatmul.mubr.f32.gmra.mrb[0].mxu0 %v1282
        %v1417 = vpop.f32.mrb[0].mxu0
        %v1418 = vadd.f32 0.0, %v1417
        %v1419 = vpop.f32.mrb[0].mxu0
        %1420 = vmatprep.mubr.f32.mxu0 0.0
        %1421 = vmatmul.mubr.f32.gmra.mrb[0].mxu0 %v1285
        %v1422 = vpop.f32.mrb[0].mxu0
        %v1423 = vadd.f32 0.0, %v1422
        %v1424 = vpop.f32.mrb[0].mxu0
        %1425 = vmatprep.mubr.f32.mxu0 0.0
        %1426 = vmatmul.mubr.f32.gmra.mrb[0].mxu0 %v1288
        %v1427 = vpop.f32.mrb[0].mxu0
        %v1428 = vadd.f32 0.0, %v1427
        %v1429 = vpop.f32.mrb[0].mxu0
        %1430 = vmatprep.mubr.f32.mxu0 0.0
        %1431 = vmatmul.mubr.f32.gmra.mrb[0].mxu0 %v1291
        %v1432 = vpop.f32.mrb[0].mxu0
        %v1433 = vadd.f32 0.0, %v1432
        %v1434 = vpop.f32.mrb[0].mxu0
        %1435 = vmatprep.mubr.f32.mxu0 0.0
        %1436 = vmatmul.mubr.f32.gmra.mrb[0].mxu0 %v1294
        %v1437 = vpop.f32.mrb[0].mxu0
        %v1438 = vadd.f32 0.0, %v1437
        %v1439 = vpop.f32.mrb[0].mxu0
        %1440 = vmatprep.mubr.f32.mxu0 0.0
        %1441 = vmatmul.mubr.f32.gmra.mrb[0].mxu0 %v1297
        %v1442 = vpop.f32.mrb[0].mxu0
        %v1443 = vadd.f32 0.0, %v1442
        %v1444 = vpop.f32.mrb[0].mxu0
        %1445 = vmatprep.mubr.f32.mxu0 0.0
        %1446 = vmatmul.mubr.f32.gmra.mrb[0].mxu0 %v1300
        %v1447 = vpop.f32.mrb[0].mxu0
        %v1448 = vadd.f32 0.0, %v1447
        %v1449 = vpop.f32.mrb[0].mxu0
        %1450 = vdwg.mxu0
        %v1451 = vmul.f32 %v1044, %v1373
        %v1452 = vmul.f32 %v1046, %v1378
        %v1453 = vmul.f32 %v1048, %v1383
        %v1454 = vmul.f32 %v1050, %v1388
        %v1455 = vmul.f32 %v1052, %v1393
        %v1456 = vmul.f32 %v1054, %v1398
        %v1457 = vmul.f32 %v1056, %v1403
        %v1458 = vmul.f32 %v1058, %v1408
        %v1459 = vmul.f32 %v1060, %v1413
        %v1460 = vmul.f32 %v1062, %v1418
        %v1461 = vmul.f32 %v1064, %v1423
        %v1462 = vmul.f32 %v1066, %v1428
        %v1463 = vmul.f32 %v1068, %v1433
        %v1464 = vmul.f32 %v1070, %v1438
        %v1465 = vmul.f32 %v1072, %v1443
        %v1466 = vmul.f32 %v1074, %v1448
        %1467 = vadd.xlane.f32.xlu0 %v1451
        %v1468 = vpop.xlane.xlu0 %1467
        %1469 = vadd.xlane.f32.xlu0 %v1452
        %v1470 = vpop.xlane.xlu0 %1469
        %1471 = vadd.xlane.f32.xlu0 %v1453
        %v1472 = vpop.xlane.xlu0 %1471
        %1473 = vadd.xlane.f32.xlu0 %v1454
        %v1474 = vpop.xlane.xlu0 %1473
        %1475 = vadd.xlane.f32.xlu0 %v1455
        %v1476 = vpop.xlane.xlu0 %1475
        %1477 = vadd.xlane.f32.xlu0 %v1456
        %v1478 = vpop.xlane.xlu0 %1477
        %1479 = vadd.xlane.f32.xlu0 %v1457
        %v1480 = vpop.xlane.xlu0 %1479
        %1481 = vadd.xlane.f32.xlu0 %v1458
        %v1482 = vpop.xlane.xlu0 %1481
        %1483 = vadd.xlane.f32.xlu0 %v1459
        %v1484 = vpop.xlane.xlu0 %1483
        %1485 = vadd.xlane.f32.xlu0 %v1460
        %v1486 = vpop.xlane.xlu0 %1485
        %1487 = vadd.xlane.f32.xlu0 %v1461
        %v1488 = vpop.xlane.xlu0 %1487
        %1489 = vadd.xlane.f32.xlu0 %v1462
        %v1490 = vpop.xlane.xlu0 %1489
        %1491 = vadd.xlane.f32.xlu0 %v1463
        %v1492 = vpop.xlane.xlu0 %1491
        %1493 = vadd.xlane.f32.xlu0 %v1464
        %v1494 = vpop.xlane.xlu0 %1493
        %1495 = vadd.xlane.f32.xlu0 %v1465
        %v1496 = vpop.xlane.xlu0 %1495
        %1497 = vadd.xlane.f32.xlu0 %v1466
        %v1498 = vpop.xlane.xlu0 %1497
        %v1499 = vmul.f32 %v1468, 0.0078125
        %v1500 = vmul.f32 %v1470, 0.0078125
        %v1501 = vmul.f32 %v1472, 0.0078125
        %v1502 = vmul.f32 %v1474, 0.0078125
        %v1503 = vmul.f32 %v1476, 0.0078125
        %v1504 = vmul.f32 %v1478, 0.0078125
        %v1505 = vmul.f32 %v1480, 0.0078125
        %v1506 = vmul.f32 %v1482, 0.0078125
        %v1507 = vmul.f32 %v1484, 0.0078125
        %v1508 = vmul.f32 %v1486, 0.0078125
        %v1509 = vmul.f32 %v1488, 0.0078125
        %v1510 = vmul.f32 %v1490, 0.0078125
        %v1511 = vmul.f32 %v1492, 0.0078125
        %v1512 = vmul.f32 %v1494, 0.0078125
        %v1513 = vmul.f32 %v1496, 0.0078125
        %v1514 = vmul.f32 %v1498, 0.0078125
        %1515 = vst [vmem:[%s370] sm:$0xff] %v1499
        %1516 = vst [vmem:[%s370 + $0x8] sm:$0xff] %v1500
        %1517 = vst [vmem:[%s370 + $0x10] sm:$0xff] %v1501
        %1518 = vst [vmem:[%s370 + $0x18] sm:$0xff] %v1502
        %1519 = vst [vmem:[%s370 + $0x20] sm:$0xff] %v1503
        %1520 = vst [vmem:[%s370 + $0x28] sm:$0xff] %v1504
        %1521 = vst [vmem:[%s370 + $0x30] sm:$0xff] %v1505
        %1522 = vst [vmem:[%s370 + $0x38] sm:$0xff] %v1506
        %1523 = vst [vmem:[%s370 + $0x40] sm:$0xff] %v1507
        %1524 = vst [vmem:[%s370 + $0x48] sm:$0xff] %v1508
        %1525 = vst [vmem:[%s370 + $0x50] sm:$0xff] %v1509
        %1526 = vst [vmem:[%s370 + $0x58] sm:$0xff] %v1510
        %1527 = vst [vmem:[%s370 + $0x60] sm:$0xff] %v1511
        %1528 = vst [vmem:[%s370 + $0x68] sm:$0xff] %v1512
        %1529 = vst [vmem:[%s370 + $0x70] sm:$0xff] %v1513
        %1530 = vst [vmem:[%s370 + $0x78] sm:$0xff] %v1514
        %s1531 = sand.u32 %s227, 1
        %s1532 = scalar_lea.sflag [#allocation4], %s1531
        %s1533 = sand.u32 %s227, 1
        %s1534 = smul.addr %s1533, 128
        %s1535 = scalar_lea.vmem [#allocation8], %s1534
        // Predicated region
        $region69: #{tpu_custom_call.1} parent=55 // pred_check
          %p1536 = pneg %p237
        $region70: #{tpu_custom_call.1} parent=55 // pred_check_branch
          %1538 = sbr.rel (%p1536) target = $region72
        $region71: #{tpu_custom_call.1} parent=55 // pred_region
          %s1539 = smul.u32 16, %s25
          %s1541 = ssub.s32 2048, 2048
          %1542 = vsyncadd %s1532, %s1541
          %s1543 = smul.addr %s1539, 128
          %s1544 = scalar_lea.hbm %s9, %s1543
          %s1545 = sshll.u32 %s1535, 4
          %s1546 = int_to_ptr.vmem [resolvable:$true] %s1545
          %1551 = dma.vmem_to_hbm [thread:$0]  %s1546, 2048, %s1544, %s1532, 128, 128, 8
        $region72: #{tpu_custom_call.1} parent=55 // pred_fallthru
          _
      $region56: #{tpu_custom_call.1} parent=5 // pred_fallthru
        _
      %p1552 = scmp.le.s32.totalorder 2, %s20
      // Predicated region
      $region73: #{tpu_custom_call.1} parent=5 // pred_check
        %p1553 = pneg %p1552
      $region74: #{tpu_custom_call.1} parent=5 // pred_check_branch
        %1555 = sbr.rel (%p1553) target = $region76
      $region75: #{tpu_custom_call.1} parent=5 // pred_region
        %s1556 = ssub.s32 %s20, 2
        // Predicated region
        $region77: #{tpu_custom_call.1} parent=75 // pred_check
          %p1557 = pneg %p243
        $region78: #{tpu_custom_call.1} parent=75 // pred_check_branch
          %1559 = sbr.rel (%p1557) target = $region80
        $region79: #{tpu_custom_call.1} parent=75 // pred_region
          %s1560 = sand.u32 %s228, 1
          %s1561 = scalar_lea.sflag [#allocation4], %s1560
          %s1562 = sand.u32 %s228, 1
          %s1563 = smul.addr %s1562, 128
          %s1564 = scalar_lea.vmem [#allocation8], %s1563
          %1565 = dma.done %s1561, 2048
        $region80: #{tpu_custom_call.1} parent=75 // pred_fallthru
          _
      $region76: #{tpu_custom_call.1} parent=5 // pred_fallthru
        _
    $region6: #{tpu_custom_call.1} parent=1 // loop_footer
      %s24 = sadd.s32 1, %s20
    $region7: #{tpu_custom_call.1} parent=1 // loop_footer_branch
      %19 = sbr.rel target = $region3
    $region8: #{tpu_custom_call.1} parent=1 // loop_exit
      _
    %1566 = vsyncpa [#allocation3], 1
    %s1567 = scalar_lea.sflag [#allocation3], 1
    %1568 = vsyncpa %s1567, 1
    %1569 = vsyncpa [#allocation6], 1
    %1570 = vsyncpa [#allocation4], 1
    %s1571 = scalar_lea.sflag [#allocation4], 1
    %1572 = vsyncpa %s1571, 1

</llo_original>
